<compile_context>
chip_gen: v7x
topology: tpu7x:2x2x1
jax: 0.10.0
libtpu: 0.0.40
codegen_flags: <defaults>
</compile_context>

<pallas_src>
import numpy as np
import jax
import jax.numpy as jnp
from jax.experimental import pallas as pl
from jax.experimental.pallas import tpu as pltpu


def _bilinear_matrix_1d(out_size: int, in_size: int) -> np.ndarray:
    """align_corners=True bilinear interpolation matrix [out_size, in_size]."""
    U = np.zeros((out_size, in_size), dtype=np.float32)
    if in_size == 1 or out_size == 1:   # degenerate sizes: guard div-by-zero
        U[:, 0] = 1.0
        return U
    scale = (in_size - 1) / (out_size - 1)
    for i in range(out_size):
        src = i * scale
        i0 = min(int(np.floor(src)), in_size - 1)
        i1 = min(i0 + 1, in_size - 1)
        w = src - i0
        U[i, i0] += 1.0 - w
        U[i, i1] += w
    return U


def _feature_pn_kernel(x1_ref, x2_ref, uwT_ref, uh_ref, w1t_ref, w2t_ref, b_ref,
                       o_ref):
    # x1_ref : [1, C1*H1, W1]  feature1 (channels-first, rows = (c,h) pairs)
    # x2_ref : [1, C2, T]      feature2 columns for this tile, T = th2*W2
    # uwT_ref: [W1, W2]        width-upsample operator (transposed)
    # uh_ref : [th2, H1]       height-upsample rows for this output tile
    # w1t_ref: [COUT, C1]      conv_left weight, transposed
    # w2t_ref: [COUT, C2]      conv_left_2 weight, transposed
    # b_ref  : [COUT, 1]       fused bias (b1 + b2)
    # o_ref  : [1, COUT, T]
    cout, c1 = w1t_ref.shape
    th2, h1 = uh_ref.shape
    _, w2 = uwT_ref.shape

    x1 = x1_ref[0]                                                    # [C1*H1, W1]

    # --- width upsample in C1-channel space (2D MXU matmul, K = W1) ---------
    t = jnp.dot(x1, uwT_ref[...], preferred_element_type=jnp.float32)  # [C1*H1, W2]
    t = t.reshape(c1, h1, w2)                                          # [C1, H1, W2]

    # --- height upsample for this tile, batched over the C1 channels --------
    uh_b = jnp.broadcast_to(uh_ref[...][None], (c1, th2, h1))          # [C1, th2, H1]
    xu = jax.lax.dot_general(
        uh_b, t,
        dimension_numbers=(((2,), (1,)), ((0,), (0,))),
        preferred_element_type=jnp.float32)                            # [C1, th2, W2]
    xu = xu.reshape(c1, th2 * w2)                                      # [C1, T]

    # --- 1x1 convs as channel contractions; spatial stays on the lane axis --
    f1 = jnp.dot(w1t_ref[...], xu, preferred_element_type=jnp.float32)        # [COUT, T]
    f2 = jnp.dot(w2t_ref[...], x2_ref[0], preferred_element_type=jnp.float32)  # [COUT, T]

    o_ref[0] = (f1 + f2 + b_ref[...]).astype(o_ref.dtype)


def _pick_h2_tile(H2: int, W2: int, target_lanes: int = 2048) -> int:
    """Pick an H2 tile height th2 such that blocks obey the (8,128) rule and
    the output tile is lane-dense.  Falls back to the full H2."""
    cands = []
    for t in range(1, H2 + 1):
        if H2 % t:
            continue
        if not ((t % 8 == 0) or (t == H2)):
            continue
        if not (((t * W2) % 128 == 0) or (t == H2)):
            continue
        cands.append(t)
    for t in cands:                      # ascending: smallest tile >= target
        if t * W2 >= target_lanes:
            return t
    return H2


def feature_pn(feature1_nchw, feature2_nchw, w1, b1, w2, b2, h2_tile=None):
    """feature1_nchw: [N, C1, H1, W1], feature2_nchw: [N, C2, 2*H1, 2*W1].
    w1: [C1, 256], b1: [256], w2: [C2, 256], b2: [256].
    Returns NCHW output [N, 256, 2*H1, 2*W1]."""
    N, C1, H1, W1 = feature1_nchw.shape
    N2, C2, H2, W2 = feature2_nchw.shape
    assert N == N2 and H2 == 2 * H1 and W2 == 2 * W1
    COUT = w1.shape[1]
    S2 = H2 * W2

    th2 = h2_tile if h2_tile is not None else _pick_h2_tile(H2, W2)
    assert H2 % th2 == 0
    assert (th2 % 8 == 0) or (th2 == H2)
    assert ((th2 * W2) % 128 == 0) or (th2 == H2)
    n_h = H2 // th2
    T = th2 * W2

    # Pure row-major reshapes only -- no transposes of the large tensors.
    x1 = feature1_nchw.reshape(N, C1 * H1, W1)
    x2 = feature2_nchw.reshape(N, C2, S2)

    # Separable bilinear operators (tiny) instead of a dense kron matrix.
    uwT = jnp.asarray(_bilinear_matrix_1d(W2, W1).T)   # [W1, W2]
    uh = jnp.asarray(_bilinear_matrix_1d(H2, H1))      # [H2, H1]

    w1t = jnp.transpose(w1)                            # [COUT, C1]  (tiny)
    w2t = jnp.transpose(w2)                            # [COUT, C2]
    # Fused bias: exact because every bilinear row sums to 1.
    b = (b1 + b2).reshape(COUT, 1)

    out_flat = pl.pallas_call(
        _feature_pn_kernel,
        out_shape=jax.ShapeDtypeStruct((N, COUT, S2), jnp.float32),
        grid_spec=pltpu.PrefetchScalarGridSpec(
            num_scalar_prefetch=0,
            grid=(N, n_h),
            in_specs=[
                pl.BlockSpec((1, C1 * H1, W1), lambda n, j: (n, 0, 0)),  # x1
                pl.BlockSpec((1, C2, T), lambda n, j: (n, 0, j)),        # x2 tile
                pl.BlockSpec((W1, W2), lambda n, j: (0, 0)),             # Uw^T
                pl.BlockSpec((th2, H1), lambda n, j: (j, 0)),            # Uh tile
                pl.BlockSpec((COUT, C1), lambda n, j: (0, 0)),           # w1^T
                pl.BlockSpec((COUT, C2), lambda n, j: (0, 0)),           # w2^T
                pl.BlockSpec((COUT, 1), lambda n, j: (0, 0)),            # bias
            ],
            out_specs=pl.BlockSpec((1, COUT, T), lambda n, j: (n, 0, j)),
        ),
        compiler_params=pltpu.CompilerParams(
            dimension_semantics=("parallel", "parallel")),
    )(x1, x2, uwT, uh, w1t, w2t, b)

    return out_flat.reshape(N, COUT, H2, W2)


def _reference(feature1_nchw, feature2_nchw, w1, b1, w2, b2):
    """Pure-JAX reference in the PyTorch order: conv -> upsample -> conv -> add."""
    _, _, H1, W1 = feature1_nchw.shape
    _, _, H2, W2 = feature2_nchw.shape
    Uh = jnp.asarray(_bilinear_matrix_1d(H2, H1))
    Uw = jnp.asarray(_bilinear_matrix_1d(W2, W1))
    f1 = jnp.einsum("nchw,ck->nkhw", feature1_nchw, w1) + b1[None, :, None, None]
    f1 = jnp.einsum("Hh,nkhw->nkHw", Uh, f1)
    f1 = jnp.einsum("Ww,nkHw->nkHW", Uw, f1)
    f2 = jnp.einsum("nchw,ck->nkhw", feature2_nchw, w2) + b2[None, :, None, None]
    return f1 + f2


if __name__ == "__main__":
    key = jax.random.PRNGKey(0)
    k1, k2, k3, k4, k5, k6, k7, k8 = jax.random.split(key, 8)

    # ---- test 1: small shapes (single spatial tile) -------------------------
    N, C1, C2 = 2, 4, 8
    H1 = W1 = 8
    COUT = 256

    feature1 = jax.random.normal(k1, (N, C1, H1, W1), jnp.float32)
    feature2 = jax.random.normal(k2, (N, C2, 2 * H1, 2 * W1), jnp.float32)
    w1 = 0.1 * jax.random.normal(k3, (C1, COUT), jnp.float32)
    b1 = 0.1 * jax.random.normal(k4, (COUT,), jnp.float32)
    w2 = 0.1 * jax.random.normal(k5, (C2, COUT), jnp.float32)
    b2 = 0.1 * jax.random.normal(k6, (COUT,), jnp.float32)

    out = jax.block_until_ready(feature_pn(feature1, feature2, w1, b1, w2, b2))
    ref = _reference(feature1, feature2, w1, b1, w2, b2)
    assert out.shape == (N, COUT, 2 * H1, 2 * W1), out.shape
    np.testing.assert_allclose(np.asarray(out), np.asarray(ref),
                               rtol=1e-4, atol=1e-4)

    # ---- test 2: exercise the multi-tile (H2-tiled) grid path ---------------
    H1b = W1b = 16
    feature1b = jax.random.normal(k7, (1, C1, H1b, W1b), jnp.float32)
    feature2b = jax.random.normal(k8, (1, C2, 2 * H1b, 2 * W1b), jnp.float32)
    outb = jax.block_until_ready(
        feature_pn(feature1b, feature2b, w1, b1, w2, b2, h2_tile=8))
    refb = _reference(feature1b, feature2b, w1, b1, w2, b2)
    np.testing.assert_allclose(np.asarray(outb), np.asarray(refb),
                               rtol=1e-4, atol=1e-4)

    print("KERNEL_OK")
</pallas_src>

<mosaic_0001>
module attributes {stable_mosaic.version = 11 : i64} {
  func.func @_feature_pn_kernel(%arg0: i32, %arg1: i32, %arg2: memref<1x32x8xf32, #tpu.memory_space<vmem>>, %arg3: memref<1x8x256xf32, #tpu.memory_space<vmem>>, %arg4: memref<8x16xf32, #tpu.memory_space<vmem>>, %arg5: memref<16x8xf32, #tpu.memory_space<vmem>>, %arg6: memref<256x4xf32, #tpu.memory_space<vmem>>, %arg7: memref<256x8xf32, #tpu.memory_space<vmem>>, %arg8: memref<256x1xf32, #tpu.memory_space<vmem>>, %arg9: memref<1x256x256xf32, #tpu.memory_space<vmem>>) attributes {dimension_semantics = [#tpu.dimension_semantics<parallel>, #tpu.dimension_semantics<parallel>], iteration_bounds = array<i64: 2, 1>, scalar_prefetch = 0 : i64, scratch_operands = 0 : i64, tpu.core_type = #tpu.core_type<tc>, window_params = [{transform_indices = @transform_0, window_bounds = array<i64: 1, 32, 8>}, {transform_indices = @transform_1, window_bounds = array<i64: 1, 8, 256>}, {pipeline_mode = #tpu.pipeline_mode<synchronous>, transform_indices = @transform_2, window_bounds = array<i64: 8, 16>}, {transform_indices = @transform_3, window_bounds = array<i64: 16, 8>}, {pipeline_mode = #tpu.pipeline_mode<synchronous>, transform_indices = @transform_4, window_bounds = array<i64: 256, 4>}, {pipeline_mode = #tpu.pipeline_mode<synchronous>, transform_indices = @transform_5, window_bounds = array<i64: 256, 8>}, {pipeline_mode = #tpu.pipeline_mode<synchronous>, transform_indices = @transform_6, window_bounds = array<i64: 256, 1>}, {transform_indices = @transform_7, window_bounds = array<i64: 1, 256, 256>}]} {
    %c0 = arith.constant 0 : index
    %c0_0 = arith.constant 0 : index
    %c0_1 = arith.constant 0 : index
    %0 = vector.load %arg2[%c0, %c0_0, %c0_1] : memref<1x32x8xf32, #tpu.memory_space<vmem>>, vector<1x32x8xf32>
    %1 = vector.shape_cast %0 : vector<1x32x8xf32> to vector<32x8xf32>
    %c0_2 = arith.constant 0 : index
    %c0_3 = arith.constant 0 : index
    %2 = vector.load %arg4[%c0_2, %c0_3] : memref<8x16xf32, #tpu.memory_space<vmem>>, vector<8x16xf32>
    %cst = arith.constant dense<0.000000e+00> : vector<32x16xf32>
    %3 = tpu.matmul %1, %2, %cst {dimension_numbers = #tpu.dot_dimension_numbers<[1], [0], [0], [1], [0, 0, 1, 1], [], []>} : vector<32x8xf32>, vector<8x16xf32>, vector<32x16xf32> -> vector<32x16xf32>
    %4 = vector.shape_cast %3 : vector<32x16xf32> to vector<4x8x16xf32>
    %c0_4 = arith.constant 0 : index
    %c0_5 = arith.constant 0 : index
    %5 = vector.load %arg5[%c0_4, %c0_5] : memref<16x8xf32, #tpu.memory_space<vmem>>, vector<16x8xf32>
    %6 = vector.shape_cast %5 : vector<16x8xf32> to vector<1x16x8xf32>
    %7 = vector.shape_cast %6 : vector<1x16x8xf32> to vector<1x16x8xf32>
    %8 = vector.broadcast %7 : vector<1x16x8xf32> to vector<4x16x8xf32>
    %cst_6 = arith.constant dense<0.000000e+00> : vector<4x16x16xf32>
    %9 = tpu.matmul %8, %4, %cst_6 {dimension_numbers = #tpu.dot_dimension_numbers<[2], [1], [1], [2], [0, 0, 0, 1, 1, 2], [0], [0]>} : vector<4x16x8xf32>, vector<4x8x16xf32>, vector<4x16x16xf32> -> vector<4x16x16xf32>
    %10 = vector.shape_cast %9 : vector<4x16x16xf32> to vector<4x256xf32>
    %c0_7 = arith.constant 0 : index
    %c0_8 = arith.constant 0 : index
    %11 = vector.load %arg6[%c0_7, %c0_8] : memref<256x4xf32, #tpu.memory_space<vmem>>, vector<256x4xf32>
    %cst_9 = arith.constant dense<0.000000e+00> : vector<256x256xf32>
    %12 = tpu.matmul %11, %10, %cst_9 {dimension_numbers = #tpu.dot_dimension_numbers<[1], [0], [0], [1], [0, 0, 1, 1], [], []>} : vector<256x4xf32>, vector<4x256xf32>, vector<256x256xf32> -> vector<256x256xf32>
    %c0_10 = arith.constant 0 : index
    %c0_11 = arith.constant 0 : index
    %13 = vector.load %arg7[%c0_10, %c0_11] : memref<256x8xf32, #tpu.memory_space<vmem>>, vector<256x8xf32>
    %c0_12 = arith.constant 0 : index
    %c0_13 = arith.constant 0 : index
    %c0_14 = arith.constant 0 : index
    %14 = vector.load %arg3[%c0_12, %c0_13, %c0_14] : memref<1x8x256xf32, #tpu.memory_space<vmem>>, vector<1x8x256xf32>
    %15 = vector.shape_cast %14 : vector<1x8x256xf32> to vector<8x256xf32>
    %cst_15 = arith.constant dense<0.000000e+00> : vector<256x256xf32>
    %16 = tpu.matmul %13, %15, %cst_15 {dimension_numbers = #tpu.dot_dimension_numbers<[1], [0], [0], [1], [0, 0, 1, 1], [], []>} : vector<256x8xf32>, vector<8x256xf32>, vector<256x256xf32> -> vector<256x256xf32>
    %17 = arith.addf %12, %16 : vector<256x256xf32>
    %c0_16 = arith.constant 0 : index
    %c0_17 = arith.constant 0 : index
    %18 = vector.load %arg8[%c0_16, %c0_17] : memref<256x1xf32, #tpu.memory_space<vmem>>, vector<256x1xf32>
    %19 = vector.broadcast %18 : vector<256x1xf32> to vector<256x256xf32>
    %20 = arith.addf %17, %19 : vector<256x256xf32>
    %c0_18 = arith.constant 0 : index
    %c0_19 = arith.constant 0 : index
    %c0_20 = arith.constant 0 : index
    %21 = vector.load %arg9[%c0_18, %c0_19, %c0_20] : memref<1x256x256xf32, #tpu.memory_space<vmem>>, vector<1x256x256xf32>
    %22 = vector.shape_cast %21 : vector<1x256x256xf32> to vector<256x256xf32>
    %23 = vector.shape_cast %20 : vector<256x256xf32> to vector<1x256x256xf32>
    tpu.vector_store %arg9[%c0_18, %c0_19, %c0_20], %23 {strides = array<i32>} : memref<1x256x256xf32, #tpu.memory_space<vmem>>, vector<1x256x256xf32>,
    return
  }
  func.func @transform_0(%arg0: i32, %arg1: i32) -> (i32, i32, i32) {
    %c0_i32 = arith.constant 0 : i32
    %c0_i32_0 = arith.constant 0 : i32
    %c0_i32_1 = arith.constant 0 : i32
    return %arg0, %c0_i32, %c0_i32_0 : i32, i32, i32
  }
  func.func @transform_1(%arg0: i32, %arg1: i32) -> (i32, i32, i32) {
    %c0_i32 = arith.constant 0 : i32
    %c0_i32_0 = arith.constant 0 : i32
    return %arg0, %c0_i32, %arg1 : i32, i32, i32
  }
  func.func @transform_2(%arg0: i32, %arg1: i32) -> (i32, i32) {
    %c0_i32 = arith.constant 0 : i32
    %c0_i32_0 = arith.constant 0 : i32
    %c0_i32_1 = arith.constant 0 : i32
    return %c0_i32, %c0_i32_0 : i32, i32
  }
  func.func @transform_3(%arg0: i32, %arg1: i32) -> (i32, i32) {
    %c0_i32 = arith.constant 0 : i32
    %c0_i32_0 = arith.constant 0 : i32
    return %arg1, %c0_i32 : i32, i32
  }
  func.func @transform_4(%arg0: i32, %arg1: i32) -> (i32, i32) {
    %c0_i32 = arith.constant 0 : i32
    %c0_i32_0 = arith.constant 0 : i32
    %c0_i32_1 = arith.constant 0 : i32
    return %c0_i32, %c0_i32_0 : i32, i32
  }
  func.func @transform_5(%arg0: i32, %arg1: i32) -> (i32, i32) {
    %c0_i32 = arith.constant 0 : i32
    %c0_i32_0 = arith.constant 0 : i32
    %c0_i32_1 = arith.constant 0 : i32
    return %c0_i32, %c0_i32_0 : i32, i32
  }
  func.func @transform_6(%arg0: i32, %arg1: i32) -> (i32, i32) {
    %c0_i32 = arith.constant 0 : i32
    %c0_i32_0 = arith.constant 0 : i32
    %c0_i32_1 = arith.constant 0 : i32
    return %c0_i32, %c0_i32_0 : i32, i32
  }
  func.func @transform_7(%arg0: i32, %arg1: i32) -> (i32, i32, i32) {
    %c0_i32 = arith.constant 0 : i32
    %c0_i32_0 = arith.constant 0 : i32
    return %arg0, %c0_i32, %arg1 : i32, i32, i32
  }
}

</mosaic_0001>

<llo_original>
// kernel: tpu_custom_call.1
$region0: #{tpu_custom_call.1}
  #allocation0 [shape = 'u32[]', space=smem, size = 0x4, offset = 0x4, fixed_abs, tag = 'smem constant byte address 0x4 - core index']
  #allocation1 [shape = 'u32[144,128]{1,0:T(1,128)}', space=vmem, size = 0x12000, scoped, tag = 'internal scratch']
  %s0 = inlined_call_operand.vmem [shape: f32[2,32,8], index: 0, kind: input, shape index: {}]
  %s1 = inlined_call_operand.vmem [shape: f32[2,8,256], index: 1, kind: input, shape index: {}]
  %s2 = inlined_call_operand.vmem [shape: f32[8,16], index: 2, kind: input, shape index: {}]
  %s3 = inlined_call_operand.vmem [shape: f32[16,8], index: 3, kind: input, shape index: {}]
  %s4 = inlined_call_operand.vmem [shape: f32[256,4], index: 4, kind: input, shape index: {}]
  %s5 = inlined_call_operand.vmem [shape: f32[256,8], index: 5, kind: input, shape index: {}]
  %s6 = inlined_call_operand.vmem [shape: f32[256,1], index: 6, kind: input, shape index: {}]
  %s7 = inlined_call_operand.hbm [shape: f32[2,256,256], index: 7, kind: output, shape index: {}]
  %s8 = sld [smem:[#allocation0]]
  $region61: #{tpu_custom_call.1} parent=0
    _
  %s10 = ssub.s32 1, %s8
  %s11 = scalar_select 0, %s10, %s8
  $region1: #{tpu_custom_call.1} parent=0
    #allocation2 [shape = 'u8[524288]{0}', space=vmem, size = 0x80000, scoped, tag = 'output window, operand 0']
    #allocation3 [shape = 's32[2]{0}', space=sflag, size = 0x8, scoped, tag = 'scoped memory for tpu_custom_call.1']
    %12 = vsyncpa [#allocation3], 0
    %s13 = scalar_lea.sflag [#allocation3], 1
    %14 = vsyncpa %s13, 0
    loop: start=0, step=1, limit=4
    $region2: #{tpu_custom_call.1} parent=1 // loop_pre_header
      _
    $region3: #{tpu_custom_call.1} parent=1 // loop_header
      %s16 = sphi 0, %s20
      %p17 = scmp.ge.s32.totalorder %s16, 4
      %s23 = sphi 0, %s35
      %s24 = sphi 0, %s31
      %s25 = sphi 0, %s23
      %s26 = sphi 0, %s24
      %s27 = sphi 0, %s25
      %s28 = sphi 0, %s26
      %s38 = sphi 0, %s40
      %s41 = sphi 0, %s38
      %s42 = sphi 0, %s41
      %s58 = sphi 0, %s42
      %s66 = sphi 0, %s68
      %s69 = sphi 0, %s66
      %s70 = sphi 0, %s69
      %s86 = sphi 0, %s70
      %s90 = sphi 0, %s90
      %s92 = sphi 0, %s90
      %s93 = sphi 0, %s92
      %s107 = sphi 0, %s93
      %s113 = sphi 0, %s115
      %s116 = sphi 0, %s113
      %s117 = sphi 0, %s116
      %s133 = sphi 0, %s117
      %s137 = sphi 0, %s137
      %s139 = sphi 0, %s137
      %s140 = sphi 0, %s139
      %s154 = sphi 0, %s140
      %s158 = sphi 0, %s158
      %s160 = sphi 0, %s158
      %s161 = sphi 0, %s160
      %s175 = sphi 0, %s161
      %s179 = sphi 0, %s179
      %s181 = sphi 0, %s179
      %s182 = sphi 0, %s181
      %s196 = sphi 0, %s182
      %s204 = sphi 0, %s206
      %s207 = sphi 0, %s204
      %s208 = sphi 0, %s207
      %s224 = sphi 0, %s208
    $region4: #{tpu_custom_call.1} parent=1 // loop_header_branch
      %19 = sbr.rel (%p17) target = $region8
    $region5: #{tpu_custom_call.1} parent=1 // loop_body
      %s21 = ssub.s32 %s16, 1
      %s22 = ssub.s32 %s16, 2
      %s29 = sadd.s32 1, %s24
      %p30 = scmp.ge.s32.totalorder %s29, 1
      %s31 = scalar_select %p30, 0, %s29
      %s32 = sadd.s32 1, %s23
      %s33 = scalar_select %p30, %s32, %s23
      %p34 = scmp.ge.s32.totalorder %s33, 2
      %s35 = scalar_select %p34, 0, %s33
      %s36 = ssub.s32 %s23, %s35
      %p37 = scmp.eq.s32.totalorder %s36, 0
      %s39 = sadd.s32 %s38, 1
      %s40 = scalar_select %p37, %s38, %s39
      %p43 = pneg %p37
      %p44 = scmp.eq.s32.totalorder %s16, 1
      %p45 = por %p43, %p44
      %p46 = scmp.ne.s32.totalorder %s38, %s41
      %p47 = scmp.eq.s32.totalorder %s16, 0
      %p48 = por %p46, %p47
      %p49 = scmp.ne.s32.totalorder %s38, %s41
      %p50 = scmp.eq.s32.totalorder %s21, 1
      %p51 = por %p49, %p50
      %p52 = scmp.ne.s32.totalorder %s41, %s42
      %p53 = scmp.eq.s32.totalorder %s21, 0
      %p54 = por %p52, %p53
      %p55 = scmp.ne.s32.totalorder %s41, %s42
      %p56 = scmp.eq.s32.totalorder %s22, 1
      %p57 = por %p55, %p56
      %p59 = scmp.ne.s32.totalorder %s42, %s58
      %p60 = scmp.eq.s32.totalorder %s22, 0
      %p61 = por %p59, %p60
      %s62 = ssub.s32 %s23, %s35
      %s63 = ssub.s32 %s24, %s31
      %s64 = sor.u32 %s62, %s63
      %p65 = scmp.eq.s32.totalorder %s64, 0
      %s67 = sadd.s32 %s66, 1
      %s68 = scalar_select %p65, %s66, %s67
      %p71 = pneg %p65
      %p72 = scmp.eq.s32.totalorder %s16, 1
      %p73 = por %p71, %p72
      %p74 = scmp.ne.s32.totalorder %s66, %s69
      %p75 = scmp.eq.s32.totalorder %s16, 0
      %p76 = por %p74, %p75
      %p77 = scmp.ne.s32.totalorder %s66, %s69
      %p78 = scmp.eq.s32.totalorder %s21, 1
      %p79 = por %p77, %p78
      %p80 = scmp.ne.s32.totalorder %s69, %s70
      %p81 = scmp.eq.s32.totalorder %s21, 0
      %p82 = por %p80, %p81
      %p83 = scmp.ne.s32.totalorder %s69, %s70
      %p84 = scmp.eq.s32.totalorder %s22, 1
      %p85 = por %p83, %p84
      %p87 = scmp.ne.s32.totalorder %s70, %s86
      %p88 = scmp.eq.s32.totalorder %s22, 0
      %p89 = por %p87, %p88
      %s91 = sadd.s32 %s90, 1
      %p94 = scmp.eq.s32.totalorder %s16, 1
      %p95 = scmp.ne.s32.totalorder %s90, %s92
      %p96 = scmp.eq.s32.totalorder %s16, 0
      %p97 = por %p95, %p96
      %p98 = scmp.ne.s32.totalorder %s90, %s92
      %p99 = scmp.eq.s32.totalorder %s21, 1
      %p100 = por %p98, %p99
      %p101 = scmp.ne.s32.totalorder %s92, %s93
      %p102 = scmp.eq.s32.totalorder %s21, 0
      %p103 = por %p101, %p102
      %p104 = scmp.ne.s32.totalorder %s92, %s93
      %p105 = scmp.eq.s32.totalorder %s22, 1
      %p106 = por %p104, %p105
      %p108 = scmp.ne.s32.totalorder %s93, %s107
      %p109 = scmp.eq.s32.totalorder %s22, 0
      %p110 = por %p108, %p109
      %s111 = ssub.s32 %s24, %s31
      %p112 = scmp.eq.s32.totalorder %s111, 0
      %s114 = sadd.s32 %s113, 1
      %s115 = scalar_select %p112, %s113, %s114
      %p118 = pneg %p112
      %p119 = scmp.eq.s32.totalorder %s16, 1
      %p120 = por %p118, %p119
      %p121 = scmp.ne.s32.totalorder %s113, %s116
      %p122 = scmp.eq.s32.totalorder %s16, 0
      %p123 = por %p121, %p122
      %p124 = scmp.ne.s32.totalorder %s113, %s116
      %p125 = scmp.eq.s32.totalorder %s21, 1
      %p126 = por %p124, %p125
      %p127 = scmp.ne.s32.totalorder %s116, %s117
      %p128 = scmp.eq.s32.totalorder %s21, 0
      %p129 = por %p127, %p128
      %p130 = scmp.ne.s32.totalorder %s116, %s117
      %p131 = scmp.eq.s32.totalorder %s22, 1
      %p132 = por %p130, %p131
      %p134 = scmp.ne.s32.totalorder %s117, %s133
      %p135 = scmp.eq.s32.totalorder %s22, 0
      %p136 = por %p134, %p135
      %s138 = sadd.s32 %s137, 1
      %p141 = scmp.eq.s32.totalorder %s16, 1
      %p142 = scmp.ne.s32.totalorder %s137, %s139
      %p143 = scmp.eq.s32.totalorder %s16, 0
      %p144 = por %p142, %p143
      %p145 = scmp.ne.s32.totalorder %s137, %s139
      %p146 = scmp.eq.s32.totalorder %s21, 1
      %p147 = por %p145, %p146
      %p148 = scmp.ne.s32.totalorder %s139, %s140
      %p149 = scmp.eq.s32.totalorder %s21, 0
      %p150 = por %p148, %p149
      %p151 = scmp.ne.s32.totalorder %s139, %s140
      %p152 = scmp.eq.s32.totalorder %s22, 1
      %p153 = por %p151, %p152
      %p155 = scmp.ne.s32.totalorder %s140, %s154
      %p156 = scmp.eq.s32.totalorder %s22, 0
      %p157 = por %p155, %p156
      %s159 = sadd.s32 %s158, 1
      %p162 = scmp.eq.s32.totalorder %s16, 1
      %p163 = scmp.ne.s32.totalorder %s158, %s160
      %p164 = scmp.eq.s32.totalorder %s16, 0
      %p165 = por %p163, %p164
      %p166 = scmp.ne.s32.totalorder %s158, %s160
      %p167 = scmp.eq.s32.totalorder %s21, 1
      %p168 = por %p166, %p167
      %p169 = scmp.ne.s32.totalorder %s160, %s161
      %p170 = scmp.eq.s32.totalorder %s21, 0
      %p171 = por %p169, %p170
      %p172 = scmp.ne.s32.totalorder %s160, %s161
      %p173 = scmp.eq.s32.totalorder %s22, 1
      %p174 = por %p172, %p173
      %p176 = scmp.ne.s32.totalorder %s161, %s175
      %p177 = scmp.eq.s32.totalorder %s22, 0
      %p178 = por %p176, %p177
      %s180 = sadd.s32 %s179, 1
      %p183 = scmp.eq.s32.totalorder %s16, 1
      %p184 = scmp.ne.s32.totalorder %s179, %s181
      %p185 = scmp.eq.s32.totalorder %s16, 0
      %p186 = por %p184, %p185
      %p187 = scmp.ne.s32.totalorder %s179, %s181
      %p188 = scmp.eq.s32.totalorder %s21, 1
      %p189 = por %p187, %p188
      %p190 = scmp.ne.s32.totalorder %s181, %s182
      %p191 = scmp.eq.s32.totalorder %s21, 0
      %p192 = por %p190, %p191
      %p193 = scmp.ne.s32.totalorder %s181, %s182
      %p194 = scmp.eq.s32.totalorder %s22, 1
      %p195 = por %p193, %p194
      %p197 = scmp.ne.s32.totalorder %s182, %s196
      %p198 = scmp.eq.s32.totalorder %s22, 0
      %p199 = por %p197, %p198
      %s200 = ssub.s32 %s23, %s35
      %s201 = ssub.s32 %s24, %s31
      %s202 = sor.u32 %s200, %s201
      %p203 = scmp.eq.s32.totalorder %s202, 0
      %s205 = sadd.s32 %s204, 1
      %s206 = scalar_select %p203, %s204, %s205
      %p209 = pneg %p203
      %p210 = scmp.eq.s32.totalorder %s16, 1
      %p211 = por %p209, %p210
      %p212 = scmp.ne.s32.totalorder %s204, %s207
      %p213 = scmp.eq.s32.totalorder %s16, 0
      %p214 = por %p212, %p213
      %p215 = scmp.ne.s32.totalorder %s204, %s207
      %p216 = scmp.eq.s32.totalorder %s21, 1
      %p217 = por %p215, %p216
      %p218 = scmp.ne.s32.totalorder %s207, %s208
      %p219 = scmp.eq.s32.totalorder %s21, 0
      %p220 = por %p218, %p219
      %p221 = scmp.ne.s32.totalorder %s207, %s208
      %p222 = scmp.eq.s32.totalorder %s22, 1
      %p223 = por %p221, %p222
      %p225 = scmp.ne.s32.totalorder %s208, %s224
      %p226 = scmp.eq.s32.totalorder %s22, 0
      %p227 = por %p225, %p226
      %p228 = scmp.le.s32.totalorder 1, %s16
      %p229 = scmp.lt.s32.totalorder %s16, 3
      %p230 = pnand %p228, %p229
      %p231 = pneg %p230
      // Predicated region
      $region9: #{tpu_custom_call.1} parent=5 // pred_check
        _
      $region10: #{tpu_custom_call.1} parent=5 // pred_check_branch
        %233 = sbr.rel (%p230) target = $region12
      $region11: #{tpu_custom_call.1} parent=5 // pred_region
        %s234 = ssub.s32 %s16, 1
        // Predicated region
        $region13: #{tpu_custom_call.1} parent=11 // pred_check
          %p235 = pneg %p103
        $region14: #{tpu_custom_call.1} parent=11 // pred_check_branch
          %237 = sbr.rel (%p235) target = $region16
        $region15: #{tpu_custom_call.1} parent=11 // pred_region
          _
        $region16: #{tpu_custom_call.1} parent=11 // pred_fallthru
          _
        // Predicated region
        $region17: #{tpu_custom_call.1} parent=11 // pred_check
          %p238 = pneg %p129
        $region18: #{tpu_custom_call.1} parent=11 // pred_check_branch
          %240 = sbr.rel (%p238) target = $region20
        $region19: #{tpu_custom_call.1} parent=11 // pred_region
          %s241 = smul.u32 2, %s26
          %p242 = scmp.lt.s32.totalorder %s241, 1
          %s243 = scalar_select %p242, %s241, 1
          %s244 = smul.addr %s243, 8
          %s245 = scalar_lea.vmem %s3, %s244
          %s246 = smul.u32 2, %s26
        $region20: #{tpu_custom_call.1} parent=11 // pred_fallthru
          _
        // Predicated region
        $region21: #{tpu_custom_call.1} parent=11 // pred_check
          %p247 = pneg %p150
        $region22: #{tpu_custom_call.1} parent=11 // pred_check_branch
          %249 = sbr.rel (%p247) target = $region24
        $region23: #{tpu_custom_call.1} parent=11 // pred_region
          _
        $region24: #{tpu_custom_call.1} parent=11 // pred_fallthru
          _
        // Predicated region
        $region25: #{tpu_custom_call.1} parent=11 // pred_check
          %p250 = pneg %p171
        $region26: #{tpu_custom_call.1} parent=11 // pred_check_branch
          %252 = sbr.rel (%p250) target = $region28
        $region27: #{tpu_custom_call.1} parent=11 // pred_region
          _
        $region28: #{tpu_custom_call.1} parent=11 // pred_fallthru
          _
        // Predicated region
        $region29: #{tpu_custom_call.1} parent=11 // pred_check
          %p253 = pneg %p192
        $region30: #{tpu_custom_call.1} parent=11 // pred_check_branch
          %255 = sbr.rel (%p253) target = $region32
        $region31: #{tpu_custom_call.1} parent=11 // pred_region
          _
        $region32: #{tpu_custom_call.1} parent=11 // pred_fallthru
          _
      $region12: #{tpu_custom_call.1} parent=5 // pred_fallthru
        _
      %p256 = scmp.lt.s32.totalorder %s16, 2
      // Predicated region
      $region33: #{tpu_custom_call.1} parent=5 // pred_check
        %p257 = pneg %p256
      $region34: #{tpu_custom_call.1} parent=5 // pred_check_branch
        %259 = sbr.rel (%p257) target = $region36
      $region35: #{tpu_custom_call.1} parent=5 // pred_region
        // Predicated region
        $region37: #{tpu_custom_call.1} parent=35 // pred_check
          %p260 = pneg %p48
        $region38: #{tpu_custom_call.1} parent=35 // pred_check_branch
          %262 = sbr.rel (%p260) target = $region40
        $region39: #{tpu_custom_call.1} parent=35 // pred_region
          %p263 = scmp.lt.s32.totalorder %s23, 1
          %s264 = scalar_select %p263, %s23, 1
          %s265 = smul.addr %s264, 4
          %s266 = smul.addr %s265, 8
          %s267 = scalar_lea.vmem %s0, %s266
        $region40: #{tpu_custom_call.1} parent=35 // pred_fallthru
          _
        // Predicated region
        $region41: #{tpu_custom_call.1} parent=35 // pred_check
          %p268 = pneg %p76
        $region42: #{tpu_custom_call.1} parent=35 // pred_check_branch
          %270 = sbr.rel (%p268) target = $region44
        $region43: #{tpu_custom_call.1} parent=35 // pred_region
          %s271 = smul.u32 2, %s24
          %p272 = scmp.lt.s32.totalorder %s23, 1
          %s273 = scalar_select %p272, %s23, 1
          %p274 = scmp.lt.s32.totalorder %s271, 1
          %s275 = scalar_select %p274, %s271, 1
          %s276 = smul.addr %s273, 2
          %s277 = sadd.s32 %s275, %s276
          %s278 = smul.addr %s277, 8
          %s279 = scalar_lea.vmem %s1, %s278
          %s280 = smul.u32 2, %s24
        $region44: #{tpu_custom_call.1} parent=35 // pred_fallthru
          _
      $region36: #{tpu_custom_call.1} parent=5 // pred_fallthru
        _
      %p281 = scmp.le.s32.totalorder 1, %s16
      %p282 = scmp.lt.s32.totalorder %s16, 3
      %p283 = pnand %p281, %p282
      %p284 = pneg %p283
      // Predicated region
      $region45: #{tpu_custom_call.1} parent=5 // pred_check
        _
      $region46: #{tpu_custom_call.1} parent=5 // pred_check_branch
        %286 = sbr.rel (%p283) target = $region48
      $region47: #{tpu_custom_call.1} parent=5 // pred_region
        %s287 = ssub.s32 %s16, 1
        %p288 = scmp.lt.s32.totalorder %s25, 1
        %s289 = scalar_select %p288, %s25, 1
        %s290 = smul.addr %s289, 4
        %s291 = smul.addr %s290, 8
        %s292 = scalar_lea.vmem %s0, %s291
        %p293 = pneg %p54
        %p294 = pneg %p51
        %s295 = smul.u32 2, %s26
        %p296 = scmp.lt.s32.totalorder %s25, 1
        %s297 = scalar_select %p296, %s25, 1
        %p298 = scmp.lt.s32.totalorder %s295, 1
        %s299 = scalar_select %p298, %s295, 1
        %s300 = smul.addr %s297, 2
        %s301 = sadd.s32 %s299, %s300
        %s302 = smul.addr %s301, 8
        %s303 = scalar_lea.vmem %s1, %s302
        %p304 = pneg %p82
        %p305 = pneg %p79
        %p306 = pneg %p103
        %p307 = pneg %p100
        %s308 = smul.u32 2, %s26
        %p309 = scmp.lt.s32.totalorder %s308, 1
        %s310 = scalar_select %p309, %s308, 1
        %s311 = smul.addr %s310, 8
        %s312 = scalar_lea.vmem %s3, %s311
        %p313 = pneg %p129
        %p314 = pneg %p126
        %p315 = pneg %p150
        %p316 = pneg %p147
        %p317 = pneg %p171
        %p318 = pneg %p168
        %p319 = pneg %p192
        %p320 = pneg %p189
        %p321 = pneg %p220
        %p322 = pneg %p217
        %s323 = sand.u32 %s207, 1
        %s324 = scalar_lea.sflag [#allocation3], %s323
        %s325 = sand.u32 %s207, 1
        %s326 = smul.addr %s325, 512
        %s327 = scalar_lea.vmem [#allocation2], %s326
        %p328 = scmp.lt.s32.totalorder %s25, 1
        %s329 = scalar_select %p328, %s25, 1
        %s330 = smul.addr %s329, 4
        %s331 = smul.addr %s330, 8
        %s332 = scalar_lea.vmem %s0, %s331
        %s333 = smul.u32 2, %s26
        %p334 = scmp.lt.s32.totalorder %s25, 1
        %s335 = scalar_select %p334, %s25, 1
        %p336 = scmp.lt.s32.totalorder %s333, 1
        %s337 = scalar_select %p336, %s333, 1
        %s338 = smul.addr %s335, 2
        %s339 = sadd.s32 %s337, %s338
        %s340 = smul.addr %s339, 8
        %s341 = scalar_lea.vmem %s1, %s340
        %s342 = smul.u32 2, %s26
        %s343 = smul.u32 2, %s26
        %p344 = scmp.lt.s32.totalorder %s343, 1
        %s345 = scalar_select %p344, %s343, 1
        %s346 = smul.addr %s345, 8
        %s347 = scalar_lea.vmem %s3, %s346
        %s348 = smul.u32 2, %s26
        %s349 = smul.u32 2, %s26
        %v350 = vld [vmem:[%s332] sm:$0xff]
        %v351 = vld [vmem:[%s332 + $0x8] sm:$0xff]
        %v352 = vld [vmem:[%s332 + $0x10] sm:$0xff]
        %v353 = vld [vmem:[%s332 + $0x18] sm:$0xff]
        %v354 = vld [vmem:[%s2] sm:$0xff]
        %vm355 = vcmask 64512
        %v357 = vsel %vm355, %v350, 0
        %v360 = vsel %vm355, %v351, 0
        %v363 = vsel %vm355, %v352, 0
        %v366 = vsel %vm355, %v353, 0
        %368 = vmatprep.subr.mxu0 0.0
        %369 = vmatpush1.msra.mxu0 %v354
        %370 = vmatprep.subr.mxu0 0.0
        %371 = vmatpush1.msra.mxu0 0.0
        %372 = vmatprep.subr.mxu0 0.0
        %373 = vmatpush1.msra.mxu0 0.0
        %374 = vmatprep.subr.mxu0 0.0
        %375 = vmatpush1.msra.mxu0 0.0
        %376 = vmatprep.subr.mxu0 0.0
        %377 = vmatpush1.msra.mxu0 0.0
        %378 = vmatprep.subr.mxu0 0.0
        %379 = vmatpush1.msra.mxu0 0.0
        %380 = vmatprep.subr.mxu0 0.0
        %381 = vmatpush1.msra.mxu0 0.0
        %382 = vmatprep.subr.mxu0 0.0
        %383 = vmatpush1.msra.mxu0 0.0
        %384 = vmatprep.subr.mxu0 0.0
        %385 = vmatpush1.msra.mxu0 0.0
        %386 = vmatprep.subr.mxu0 0.0
        %387 = vmatpush1.msra.mxu0 0.0
        %388 = vmatprep.subr.mxu0 0.0
        %389 = vmatpush1.msra.mxu0 0.0
        %390 = vmatprep.subr.mxu0 0.0
        %391 = vmatpush1.msra.mxu0 0.0
        %392 = vmatprep.subr.mxu0 0.0
        %393 = vmatpush1.msra.mxu0 0.0
        %394 = vmatprep.subr.mxu0 0.0
        %395 = vmatpush1.msra.mxu0 0.0
        %396 = vmatprep.subr.mxu0 0.0
        %397 = vmatpush1.msra.mxu0 0.0
        %398 = vmatprep.subr.mxu0 0.0
        %399 = vmatpush1.msra.mxu0 0.0
        %400 = vmatprep.subr.mxu0 0.0
        %401 = vmatpush1.msra.mxu0 0.0
        %402 = vmatprep.subr.mxu0 0.0
        %403 = vmatpush1.msra.mxu0 0.0
        %404 = vmatprep.subr.mxu0 0.0
        %405 = vmatpush1.msra.mxu0 0.0
        %406 = vmatprep.subr.mxu0 0.0
        %407 = vmatpush1.msra.mxu0 0.0
        %408 = vmatprep.subr.mxu0 0.0
        %409 = vmatpush1.msra.mxu0 0.0
        %410 = vmatprep.subr.mxu0 0.0
        %411 = vmatpush1.msra.mxu0 0.0
        %412 = vmatprep.subr.mxu0 0.0
        %413 = vmatpush1.msra.mxu0 0.0
        %414 = vmatprep.subr.mxu0 0.0
        %415 = vmatpush1.msra.mxu0 0.0
        %416 = vmatprep.subr.mxu0 0.0
        %417 = vmatpush1.msra.mxu0 0.0
        %418 = vmatprep.subr.mxu0 0.0
        %419 = vmatpush1.msra.mxu0 0.0
        %420 = vmatprep.subr.mxu0 0.0
        %421 = vmatpush1.msra.mxu0 0.0
        %422 = vmatprep.subr.mxu0 0.0
        %423 = vmatpush1.msra.mxu0 0.0
        %424 = vmatprep.subr.mxu0 0.0
        %425 = vmatpush1.msra.mxu0 0.0
        %426 = vmatprep.subr.mxu0 0.0
        %427 = vmatpush1.msra.mxu0 0.0
        %428 = vmatprep.subr.mxu0 0.0
        %429 = vmatpush1.msra.mxu0 0.0
        %430 = vmatprep.subr.mxu0 0.0
        %431 = vmatpush1.msra.mxu0 0.0
        %432 = vmatprep.mubr.f32.mxu0 0.0
        %433 = vmatmul.mubr.f32.gmra.mrb[0].mxu0 %v357
        %v434 = vpop.f32.mrb[0].mxu0
        %v435 = vadd.f32 0.0, %v434
        %v436 = vpop.f32.mrb[0].mxu0
        %437 = vmatprep.mubr.f32.mxu0 0.0
        %438 = vmatmul.mubr.f32.gmra.mrb[0].mxu0 %v360
        %v439 = vpop.f32.mrb[0].mxu0
        %v440 = vadd.f32 0.0, %v439
        %v441 = vpop.f32.mrb[0].mxu0
        %442 = vmatprep.mubr.f32.mxu0 0.0
        %443 = vmatmul.mubr.f32.gmra.mrb[0].mxu0 %v363
        %v444 = vpop.f32.mrb[0].mxu0
        %v445 = vadd.f32 0.0, %v444
        %v446 = vpop.f32.mrb[0].mxu0
        %447 = vmatprep.mubr.f32.mxu0 0.0
        %448 = vmatmul.mubr.f32.gmra.mrb[0].mxu0 %v366
        %v449 = vpop.f32.mrb[0].mxu0
        %v450 = vadd.f32 0.0, %v449
        %v451 = vpop.f32.mrb[0].mxu0
        %452 = vdwg.mxu0
        %v453 = vld [vmem:[%s347] sm:$0xff]
        %v454 = vld [vmem:[%s347 + $0x8] sm:$0xff]
        %v456 = vsel %vm355, %v453, 0
        %v459 = vsel %vm355, %v454, 0
        %461 = vmatprep.subr.mxu0 0.0
        %462 = vmatpush1.msra.mxu0 %v435
        %463 = vmatprep.subr.mxu0 0.0
        %464 = vmatpush1.msra.mxu0 0.0
        %465 = vmatprep.subr.mxu0 0.0
        %466 = vmatpush1.msra.mxu0 0.0
        %467 = vmatprep.subr.mxu0 0.0
        %468 = vmatpush1.msra.mxu0 0.0
        %469 = vmatprep.subr.mxu0 0.0
        %470 = vmatpush1.msra.mxu0 0.0
        %471 = vmatprep.subr.mxu0 0.0
        %472 = vmatpush1.msra.mxu0 0.0
        %473 = vmatprep.subr.mxu0 0.0
        %474 = vmatpush1.msra.mxu0 0.0
        %475 = vmatprep.subr.mxu0 0.0
        %476 = vmatpush1.msra.mxu0 0.0
        %477 = vmatprep.subr.mxu0 0.0
        %478 = vmatpush1.msra.mxu0 0.0
        %479 = vmatprep.subr.mxu0 0.0
        %480 = vmatpush1.msra.mxu0 0.0
        %481 = vmatprep.subr.mxu0 0.0
        %482 = vmatpush1.msra.mxu0 0.0
        %483 = vmatprep.subr.mxu0 0.0
        %484 = vmatpush1.msra.mxu0 0.0
        %485 = vmatprep.subr.mxu0 0.0
        %486 = vmatpush1.msra.mxu0 0.0
        %487 = vmatprep.subr.mxu0 0.0
        %488 = vmatpush1.msra.mxu0 0.0
        %489 = vmatprep.subr.mxu0 0.0
        %490 = vmatpush1.msra.mxu0 0.0
        %491 = vmatprep.subr.mxu0 0.0
        %492 = vmatpush1.msra.mxu0 0.0
        %493 = vmatprep.subr.mxu0 0.0
        %494 = vmatpush1.msra.mxu0 0.0
        %495 = vmatprep.subr.mxu0 0.0
        %496 = vmatpush1.msra.mxu0 0.0
        %497 = vmatprep.subr.mxu0 0.0
        %498 = vmatpush1.msra.mxu0 0.0
        %499 = vmatprep.subr.mxu0 0.0
        %500 = vmatpush1.msra.mxu0 0.0
        %501 = vmatprep.subr.mxu0 0.0
        %502 = vmatpush1.msra.mxu0 0.0
        %503 = vmatprep.subr.mxu0 0.0
        %504 = vmatpush1.msra.mxu0 0.0
        %505 = vmatprep.subr.mxu0 0.0
        %506 = vmatpush1.msra.mxu0 0.0
        %507 = vmatprep.subr.mxu0 0.0
        %508 = vmatpush1.msra.mxu0 0.0
        %509 = vmatprep.subr.mxu0 0.0
        %510 = vmatpush1.msra.mxu0 0.0
        %511 = vmatprep.subr.mxu0 0.0
        %512 = vmatpush1.msra.mxu0 0.0
        %513 = vmatprep.subr.mxu0 0.0
        %514 = vmatpush1.msra.mxu0 0.0
        %515 = vmatprep.subr.mxu0 0.0
        %516 = vmatpush1.msra.mxu0 0.0
        %517 = vmatprep.subr.mxu0 0.0
        %518 = vmatpush1.msra.mxu0 0.0
        %519 = vmatprep.subr.mxu0 0.0
        %520 = vmatpush1.msra.mxu0 0.0
        %521 = vmatprep.subr.mxu0 0.0
        %522 = vmatpush1.msra.mxu0 0.0
        %523 = vmatprep.subr.mxu0 0.0
        %524 = vmatpush1.msra.mxu0 0.0
        %525 = vmatprep.mubr.f32.mxu0 0.0
        %526 = vmatmul.mubr.f32.gmra.mrb[0].mxu0 %v456
        %v527 = vpop.f32.mrb[0].mxu0
        %v528 = vadd.f32 0.0, %v527
        %v529 = vpop.f32.mrb[0].mxu0
        %530 = vmatprep.mubr.f32.mxu0 0.0
        %531 = vmatmul.mubr.f32.gmra.mrb[0].mxu0 %v459
        %v532 = vpop.f32.mrb[0].mxu0
        %v533 = vadd.f32 0.0, %v532
        %v534 = vpop.f32.mrb[0].mxu0
        %535 = vdwg.mxu0
        %536 = vmatprep.subr.mxu0 0.0
        %537 = vmatpush1.msra.mxu0 %v440
        %538 = vmatprep.subr.mxu0 0.0
        %539 = vmatpush1.msra.mxu0 0.0
        %540 = vmatprep.subr.mxu0 0.0
        %541 = vmatpush1.msra.mxu0 0.0
        %542 = vmatprep.subr.mxu0 0.0
        %543 = vmatpush1.msra.mxu0 0.0
        %544 = vmatprep.subr.mxu0 0.0
        %545 = vmatpush1.msra.mxu0 0.0
        %546 = vmatprep.subr.mxu0 0.0
        %547 = vmatpush1.msra.mxu0 0.0
        %548 = vmatprep.subr.mxu0 0.0
        %549 = vmatpush1.msra.mxu0 0.0
        %550 = vmatprep.subr.mxu0 0.0
        %551 = vmatpush1.msra.mxu0 0.0
        %552 = vmatprep.subr.mxu0 0.0
        %553 = vmatpush1.msra.mxu0 0.0
        %554 = vmatprep.subr.mxu0 0.0
        %555 = vmatpush1.msra.mxu0 0.0
        %556 = vmatprep.subr.mxu0 0.0
        %557 = vmatpush1.msra.mxu0 0.0
        %558 = vmatprep.subr.mxu0 0.0
        %559 = vmatpush1.msra.mxu0 0.0
        %560 = vmatprep.subr.mxu0 0.0
        %561 = vmatpush1.msra.mxu0 0.0
        %562 = vmatprep.subr.mxu0 0.0
        %563 = vmatpush1.msra.mxu0 0.0
        %564 = vmatprep.subr.mxu0 0.0
        %565 = vmatpush1.msra.mxu0 0.0
        %566 = vmatprep.subr.mxu0 0.0
        %567 = vmatpush1.msra.mxu0 0.0
        %568 = vmatprep.subr.mxu0 0.0
        %569 = vmatpush1.msra.mxu0 0.0
        %570 = vmatprep.subr.mxu0 0.0
        %571 = vmatpush1.msra.mxu0 0.0
        %572 = vmatprep.subr.mxu0 0.0
        %573 = vmatpush1.msra.mxu0 0.0
        %574 = vmatprep.subr.mxu0 0.0
        %575 = vmatpush1.msra.mxu0 0.0
        %576 = vmatprep.subr.mxu0 0.0
        %577 = vmatpush1.msra.mxu0 0.0
        %578 = vmatprep.subr.mxu0 0.0
        %579 = vmatpush1.msra.mxu0 0.0
        %580 = vmatprep.subr.mxu0 0.0
        %581 = vmatpush1.msra.mxu0 0.0
        %582 = vmatprep.subr.mxu0 0.0
        %583 = vmatpush1.msra.mxu0 0.0
        %584 = vmatprep.subr.mxu0 0.0
        %585 = vmatpush1.msra.mxu0 0.0
        %586 = vmatprep.subr.mxu0 0.0
        %587 = vmatpush1.msra.mxu0 0.0
        %588 = vmatprep.subr.mxu0 0.0
        %589 = vmatpush1.msra.mxu0 0.0
        %590 = vmatprep.subr.mxu0 0.0
        %591 = vmatpush1.msra.mxu0 0.0
        %592 = vmatprep.subr.mxu0 0.0
        %593 = vmatpush1.msra.mxu0 0.0
        %594 = vmatprep.subr.mxu0 0.0
        %595 = vmatpush1.msra.mxu0 0.0
        %596 = vmatprep.subr.mxu0 0.0
        %597 = vmatpush1.msra.mxu0 0.0
        %598 = vmatprep.subr.mxu0 0.0
        %599 = vmatpush1.msra.mxu0 0.0
        %600 = vmatprep.mubr.f32.mxu0 0.0
        %601 = vmatmul.mubr.f32.gmra.mrb[0].mxu0 %v456
        %v602 = vpop.f32.mrb[0].mxu0
        %v603 = vadd.f32 0.0, %v602
        %v604 = vpop.f32.mrb[0].mxu0
        %605 = vmatprep.mubr.f32.mxu0 0.0
        %606 = vmatmul.mubr.f32.gmra.mrb[0].mxu0 %v459
        %v607 = vpop.f32.mrb[0].mxu0
        %v608 = vadd.f32 0.0, %v607
        %v609 = vpop.f32.mrb[0].mxu0
        %610 = vdwg.mxu0
        %611 = vmatprep.subr.mxu0 0.0
        %612 = vmatpush1.msra.mxu0 %v445
        %613 = vmatprep.subr.mxu0 0.0
        %614 = vmatpush1.msra.mxu0 0.0
        %615 = vmatprep.subr.mxu0 0.0
        %616 = vmatpush1.msra.mxu0 0.0
        %617 = vmatprep.subr.mxu0 0.0
        %618 = vmatpush1.msra.mxu0 0.0
        %619 = vmatprep.subr.mxu0 0.0
        %620 = vmatpush1.msra.mxu0 0.0
        %621 = vmatprep.subr.mxu0 0.0
        %622 = vmatpush1.msra.mxu0 0.0
        %623 = vmatprep.subr.mxu0 0.0
        %624 = vmatpush1.msra.mxu0 0.0
        %625 = vmatprep.subr.mxu0 0.0
        %626 = vmatpush1.msra.mxu0 0.0
        %627 = vmatprep.subr.mxu0 0.0
        %628 = vmatpush1.msra.mxu0 0.0
        %629 = vmatprep.subr.mxu0 0.0
        %630 = vmatpush1.msra.mxu0 0.0
        %631 = vmatprep.subr.mxu0 0.0
        %632 = vmatpush1.msra.mxu0 0.0
        %633 = vmatprep.subr.mxu0 0.0
        %634 = vmatpush1.msra.mxu0 0.0
        %635 = vmatprep.subr.mxu0 0.0
        %636 = vmatpush1.msra.mxu0 0.0
        %637 = vmatprep.subr.mxu0 0.0
        %638 = vmatpush1.msra.mxu0 0.0
        %639 = vmatprep.subr.mxu0 0.0
        %640 = vmatpush1.msra.mxu0 0.0
        %641 = vmatprep.subr.mxu0 0.0
        %642 = vmatpush1.msra.mxu0 0.0
        %643 = vmatprep.subr.mxu0 0.0
        %644 = vmatpush1.msra.mxu0 0.0
        %645 = vmatprep.subr.mxu0 0.0
        %646 = vmatpush1.msra.mxu0 0.0
        %647 = vmatprep.subr.mxu0 0.0
        %648 = vmatpush1.msra.mxu0 0.0
        %649 = vmatprep.subr.mxu0 0.0
        %650 = vmatpush1.msra.mxu0 0.0
        %651 = vmatprep.subr.mxu0 0.0
        %652 = vmatpush1.msra.mxu0 0.0
        %653 = vmatprep.subr.mxu0 0.0
        %654 = vmatpush1.msra.mxu0 0.0
        %655 = vmatprep.subr.mxu0 0.0
        %656 = vmatpush1.msra.mxu0 0.0
        %657 = vmatprep.subr.mxu0 0.0
        %658 = vmatpush1.msra.mxu0 0.0
        %659 = vmatprep.subr.mxu0 0.0
        %660 = vmatpush1.msra.mxu0 0.0
        %661 = vmatprep.subr.mxu0 0.0
        %662 = vmatpush1.msra.mxu0 0.0
        %663 = vmatprep.subr.mxu0 0.0
        %664 = vmatpush1.msra.mxu0 0.0
        %665 = vmatprep.subr.mxu0 0.0
        %666 = vmatpush1.msra.mxu0 0.0
        %667 = vmatprep.subr.mxu0 0.0
        %668 = vmatpush1.msra.mxu0 0.0
        %669 = vmatprep.subr.mxu0 0.0
        %670 = vmatpush1.msra.mxu0 0.0
        %671 = vmatprep.subr.mxu0 0.0
        %672 = vmatpush1.msra.mxu0 0.0
        %673 = vmatprep.subr.mxu0 0.0
        %674 = vmatpush1.msra.mxu0 0.0
        %675 = vmatprep.mubr.f32.mxu0 0.0
        %676 = vmatmul.mubr.f32.gmra.mrb[0].mxu0 %v456
        %v677 = vpop.f32.mrb[0].mxu0
        %v678 = vadd.f32 0.0, %v677
        %v679 = vpop.f32.mrb[0].mxu0
        %680 = vmatprep.mubr.f32.mxu0 0.0
        %681 = vmatmul.mubr.f32.gmra.mrb[0].mxu0 %v459
        %v682 = vpop.f32.mrb[0].mxu0
        %v683 = vadd.f32 0.0, %v682
        %v684 = vpop.f32.mrb[0].mxu0
        %685 = vdwg.mxu0
        %686 = vmatprep.subr.mxu0 0.0
        %687 = vmatpush1.msra.mxu0 %v450
        %688 = vmatprep.subr.mxu0 0.0
        %689 = vmatpush1.msra.mxu0 0.0
        %690 = vmatprep.subr.mxu0 0.0
        %691 = vmatpush1.msra.mxu0 0.0
        %692 = vmatprep.subr.mxu0 0.0
        %693 = vmatpush1.msra.mxu0 0.0
        %694 = vmatprep.subr.mxu0 0.0
        %695 = vmatpush1.msra.mxu0 0.0
        %696 = vmatprep.subr.mxu0 0.0
        %697 = vmatpush1.msra.mxu0 0.0
        %698 = vmatprep.subr.mxu0 0.0
        %699 = vmatpush1.msra.mxu0 0.0
        %700 = vmatprep.subr.mxu0 0.0
        %701 = vmatpush1.msra.mxu0 0.0
        %702 = vmatprep.subr.mxu0 0.0
        %703 = vmatpush1.msra.mxu0 0.0
        %704 = vmatprep.subr.mxu0 0.0
        %705 = vmatpush1.msra.mxu0 0.0
        %706 = vmatprep.subr.mxu0 0.0
        %707 = vmatpush1.msra.mxu0 0.0
        %708 = vmatprep.subr.mxu0 0.0
        %709 = vmatpush1.msra.mxu0 0.0
        %710 = vmatprep.subr.mxu0 0.0
        %711 = vmatpush1.msra.mxu0 0.0
        %712 = vmatprep.subr.mxu0 0.0
        %713 = vmatpush1.msra.mxu0 0.0
        %714 = vmatprep.subr.mxu0 0.0
        %715 = vmatpush1.msra.mxu0 0.0
        %716 = vmatprep.subr.mxu0 0.0
        %717 = vmatpush1.msra.mxu0 0.0
        %718 = vmatprep.subr.mxu0 0.0
        %719 = vmatpush1.msra.mxu0 0.0
        %720 = vmatprep.subr.mxu0 0.0
        %721 = vmatpush1.msra.mxu0 0.0
        %722 = vmatprep.subr.mxu0 0.0
        %723 = vmatpush1.msra.mxu0 0.0
        %724 = vmatprep.subr.mxu0 0.0
        %725 = vmatpush1.msra.mxu0 0.0
        %726 = vmatprep.subr.mxu0 0.0
        %727 = vmatpush1.msra.mxu0 0.0
        %728 = vmatprep.subr.mxu0 0.0
        %729 = vmatpush1.msra.mxu0 0.0
        %730 = vmatprep.subr.mxu0 0.0
        %731 = vmatpush1.msra.mxu0 0.0
        %732 = vmatprep.subr.mxu0 0.0
        %733 = vmatpush1.msra.mxu0 0.0
        %734 = vmatprep.subr.mxu0 0.0
        %735 = vmatpush1.msra.mxu0 0.0
        %736 = vmatprep.subr.mxu0 0.0
        %737 = vmatpush1.msra.mxu0 0.0
        %738 = vmatprep.subr.mxu0 0.0
        %739 = vmatpush1.msra.mxu0 0.0
        %740 = vmatprep.subr.mxu0 0.0
        %741 = vmatpush1.msra.mxu0 0.0
        %742 = vmatprep.subr.mxu0 0.0
        %743 = vmatpush1.msra.mxu0 0.0
        %744 = vmatprep.subr.mxu0 0.0
        %745 = vmatpush1.msra.mxu0 0.0
        %746 = vmatprep.subr.mxu0 0.0
        %747 = vmatpush1.msra.mxu0 0.0
        %748 = vmatprep.subr.mxu0 0.0
        %749 = vmatpush1.msra.mxu0 0.0
        %750 = vmatprep.mubr.f32.mxu0 0.0
        %751 = vmatmul.mubr.f32.gmra.mrb[0].mxu0 %v456
        %v752 = vpop.f32.mrb[0].mxu0
        %v753 = vadd.f32 0.0, %v752
        %v754 = vpop.f32.mrb[0].mxu0
        %755 = vmatprep.mubr.f32.mxu0 0.0
        %756 = vmatmul.mubr.f32.gmra.mrb[0].mxu0 %v459
        %v757 = vpop.f32.mrb[0].mxu0
        %v758 = vadd.f32 0.0, %v757
        %v759 = vpop.f32.mrb[0].mxu0
        %760 = vdwg.mxu0
        %v761 = vcombine.low %v528, %v678
        %v762 = vcombine.high %v528, %v678
        %v764 = vunpack.c.l.s4 1983009808
        %v765 = vunpack.c.0.s8 %v764
        %v766 = vlaneseq
        %v767 = vshrl.u32 %v766, 7
        %v768 = vsub.s32 %v765, %v767
        %v769 = vrot.slane %v761, %v768
        %v771 = vunpack.c.l.s4 1983009808
        %v772 = vunpack.c.0.s8 %v771
        %v773 = vlaneseq
        %v774 = vshrl.u32 %v773, 7
        %v775 = vsub.s32 %v772, %v774
        %v776 = vrot.slane %v762, %v775
        %v777 = vcombine.low %v603, %v753
        %v778 = vcombine.high %v603, %v753
        %v780 = vunpack.c.l.s4 1983009808
        %v781 = vunpack.c.0.s8 %v780
        %v782 = vlaneseq
        %v783 = vshrl.u32 %v782, 7
        %v784 = vsub.s32 %v781, %v783
        %v785 = vrot.slane %v777, %v784
        %v787 = vunpack.c.l.s4 1983009808
        %v788 = vunpack.c.0.s8 %v787
        %v789 = vlaneseq
        %v790 = vshrl.u32 %v789, 7
        %v791 = vsub.s32 %v788, %v790
        %v792 = vrot.slane %v778, %v791
        %v793 = vcombine.low %v769, %v785
        %v794 = vcombine.high %v769, %v785
        %v796 = vunpack.c.l.s4 1934713408
        %v797 = vunpack.c.0.s8 %v796
        %v798 = vlaneseq
        %v799 = vshrl.u32 %v798, 7
        %v800 = vsub.s32 %v797, %v799
        %v801 = vrot.slane %v793, %v800
        %v803 = vunpack.c.l.s4 1934713408
        %v804 = vunpack.c.0.s8 %v803
        %v805 = vlaneseq
        %v806 = vshrl.u32 %v805, 7
        %v807 = vsub.s32 %v804, %v806
        %v808 = vrot.slane %v794, %v807
        %v809 = vcombine.low %v776, %v792
        %v810 = vcombine.high %v776, %v792
        %v812 = vunpack.c.l.s4 1934713408
        %v813 = vunpack.c.0.s8 %v812
        %v814 = vlaneseq
        %v815 = vshrl.u32 %v814, 7
        %v816 = vsub.s32 %v813, %v815
        %v817 = vrot.slane %v809, %v816
        %v819 = vunpack.c.l.s4 1934713408
        %v820 = vunpack.c.0.s8 %v819
        %v821 = vlaneseq
        %v822 = vshrl.u32 %v821, 7
        %v823 = vsub.s32 %v820, %v822
        %v824 = vrot.slane %v810, %v823
        %v825 = vcombine.high %v801, 0.0
        %v826 = vcombine.high %v808, 0.0
        %v827 = vcombine.high %v817, 0.0
        %v828 = vcombine.high %v824, 0.0
        %v829 = vcombine.low %v533, %v683
        %v830 = vcombine.high %v533, %v683
        %v832 = vunpack.c.l.s4 1983009808
        %v833 = vunpack.c.0.s8 %v832
        %v834 = vlaneseq
        %v835 = vshrl.u32 %v834, 7
        %v836 = vsub.s32 %v833, %v835
        %v837 = vrot.slane %v829, %v836
        %v839 = vunpack.c.l.s4 1983009808
        %v840 = vunpack.c.0.s8 %v839
        %v841 = vlaneseq
        %v842 = vshrl.u32 %v841, 7
        %v843 = vsub.s32 %v840, %v842
        %v844 = vrot.slane %v830, %v843
        %v845 = vcombine.low %v608, %v758
        %v846 = vcombine.high %v608, %v758
        %v848 = vunpack.c.l.s4 1983009808
        %v849 = vunpack.c.0.s8 %v848
        %v850 = vlaneseq
        %v851 = vshrl.u32 %v850, 7
        %v852 = vsub.s32 %v849, %v851
        %v853 = vrot.slane %v845, %v852
        %v855 = vunpack.c.l.s4 1983009808
        %v856 = vunpack.c.0.s8 %v855
        %v857 = vlaneseq
        %v858 = vshrl.u32 %v857, 7
        %v859 = vsub.s32 %v856, %v858
        %v860 = vrot.slane %v846, %v859
        %v861 = vcombine.low %v837, %v853
        %v862 = vcombine.high %v837, %v853
        %v864 = vunpack.c.l.s4 1934713408
        %v865 = vunpack.c.0.s8 %v864
        %v866 = vlaneseq
        %v867 = vshrl.u32 %v866, 7
        %v868 = vsub.s32 %v865, %v867
        %v869 = vrot.slane %v861, %v868
        %v871 = vunpack.c.l.s4 1934713408
        %v872 = vunpack.c.0.s8 %v871
        %v873 = vlaneseq
        %v874 = vshrl.u32 %v873, 7
        %v875 = vsub.s32 %v872, %v874
        %v876 = vrot.slane %v862, %v875
        %v877 = vcombine.low %v844, %v860
        %v878 = vcombine.high %v844, %v860
        %v880 = vunpack.c.l.s4 1934713408
        %v881 = vunpack.c.0.s8 %v880
        %v882 = vlaneseq
        %v883 = vshrl.u32 %v882, 7
        %v884 = vsub.s32 %v881, %v883
        %v885 = vrot.slane %v877, %v884
        %v887 = vunpack.c.l.s4 1934713408
        %v888 = vunpack.c.0.s8 %v887
        %v889 = vlaneseq
        %v890 = vshrl.u32 %v889, 7
        %v891 = vsub.s32 %v888, %v890
        %v892 = vrot.slane %v878, %v891
        %v893 = vcombine.high %v869, 0.0
        %v894 = vcombine.high %v876, 0.0
        %v895 = vcombine.high %v885, 0.0
        %v896 = vcombine.high %v892, 0.0
        %898 = vrot.lane.b32.xlu0 %v825, 16
        %v899 = vpop.permute.xlu0 %898
        %902 = vrot.lane.b32.xlu0 %v808, 32
        %v903 = vpop.permute.xlu0 %902
        %906 = vrot.lane.b32.xlu0 %v826, 48
        %v907 = vpop.permute.xlu0 %906
        %910 = vrot.lane.b32.xlu0 %v817, 64
        %v911 = vpop.permute.xlu0 %910
        %914 = vrot.lane.b32.xlu0 %v827, 80
        %v915 = vpop.permute.xlu0 %914
        %918 = vrot.lane.b32.xlu0 %v824, 96
        %v919 = vpop.permute.xlu0 %918
        %922 = vrot.lane.b32.xlu0 %v828, 112
        %v923 = vpop.permute.xlu0 %922
        %926 = vrot.lane.b32.xlu0 %v893, 16
        %v927 = vpop.permute.xlu0 %926
        %930 = vrot.lane.b32.xlu0 %v876, 32
        %v931 = vpop.permute.xlu0 %930
        %934 = vrot.lane.b32.xlu0 %v894, 48
        %v935 = vpop.permute.xlu0 %934
        %938 = vrot.lane.b32.xlu0 %v885, 64
        %v939 = vpop.permute.xlu0 %938
        %942 = vrot.lane.b32.xlu0 %v895, 80
        %v943 = vpop.permute.xlu0 %942
        %946 = vrot.lane.b32.xlu0 %v892, 96
        %v947 = vpop.permute.xlu0 %946
        %950 = vrot.lane.b32.xlu0 %v896, 112
        %v951 = vpop.permute.xlu0 %950
        %vm953 = vcmask 130048
        %v954 = vsel %vm953, %v801, %v899
        %vm955 = vcmask 261120
        %v956 = vsel %vm955, %v954, %v903
        %vm957 = vcmask 392192
        %v958 = vsel %vm957, %v956, %v907
        %vm959 = vcmask 523264
        %v960 = vsel %vm959, %v958, %v911
        %vm961 = vcmask 654336
        %v962 = vsel %vm961, %v960, %v915
        %vm963 = vcmask 785408
        %v964 = vsel %vm963, %v962, %v919
        %vm965 = vcmask 916480
        %v966 = vsel %vm965, %v964, %v923
        %v967 = vsel %vm953, %v869, %v927
        %v968 = vsel %vm955, %v967, %v931
        %v969 = vsel %vm957, %v968, %v935
        %v970 = vsel %vm959, %v969, %v939
        %v971 = vsel %vm961, %v970, %v943
        %v972 = vsel %vm963, %v971, %v947
        %v973 = vsel %vm965, %v972, %v951
        %v974 = vld [vmem:[%s4] sm:$0xff]
        %v975 = vld [vmem:[%s4 + $0x8] sm:$0xff]
        %v976 = vld [vmem:[%s4 + $0x10] sm:$0xff]
        %v977 = vld [vmem:[%s4 + $0x18] sm:$0xff]
        %v978 = vld [vmem:[%s4 + $0x20] sm:$0xff]
        %v979 = vld [vmem:[%s4 + $0x28] sm:$0xff]
        %v980 = vld [vmem:[%s4 + $0x30] sm:$0xff]
        %v981 = vld [vmem:[%s4 + $0x38] sm:$0xff]
        %v982 = vld [vmem:[%s4 + $0x40] sm:$0xff]
        %v983 = vld [vmem:[%s4 + $0x48] sm:$0xff]
        %v984 = vld [vmem:[%s4 + $0x50] sm:$0xff]
        %v985 = vld [vmem:[%s4 + $0x58] sm:$0xff]
        %v986 = vld [vmem:[%s4 + $0x60] sm:$0xff]
        %v987 = vld [vmem:[%s4 + $0x68] sm:$0xff]
        %v988 = vld [vmem:[%s4 + $0x70] sm:$0xff]
        %v989 = vld [vmem:[%s4 + $0x78] sm:$0xff]
        %v990 = vld [vmem:[%s4 + $0x80] sm:$0xff]
        %v991 = vld [vmem:[%s4 + $0x88] sm:$0xff]
        %v992 = vld [vmem:[%s4 + $0x90] sm:$0xff]
        %v993 = vld [vmem:[%s4 + $0x98] sm:$0xff]
        %v994 = vld [vmem:[%s4 + $0xa0] sm:$0xff]
        %v995 = vld [vmem:[%s4 + $0xa8] sm:$0xff]
        %v996 = vld [vmem:[%s4 + $0xb0] sm:$0xff]
        %v997 = vld [vmem:[%s4 + $0xb8] sm:$0xff]
        %v998 = vld [vmem:[%s4 + $0xc0] sm:$0xff]
        %v999 = vld [vmem:[%s4 + $0xc8] sm:$0xff]
        %v1000 = vld [vmem:[%s4 + $0xd0] sm:$0xff]
        %v1001 = vld [vmem:[%s4 + $0xd8] sm:$0xff]
        %v1002 = vld [vmem:[%s4 + $0xe0] sm:$0xff]
        %v1003 = vld [vmem:[%s4 + $0xe8] sm:$0xff]
        %v1004 = vld [vmem:[%s4 + $0xf0] sm:$0xff]
        %v1005 = vld [vmem:[%s4 + $0xf8] sm:$0xff]
        %v1006 = vld [vmem:[%s5] sm:$0xff]
        %v1007 = vld [vmem:[%s5 + $0x8] sm:$0xff]
        %v1008 = vld [vmem:[%s5 + $0x10] sm:$0xff]
        %v1009 = vld [vmem:[%s5 + $0x18] sm:$0xff]
        %v1010 = vld [vmem:[%s5 + $0x20] sm:$0xff]
        %v1011 = vld [vmem:[%s5 + $0x28] sm:$0xff]
        %v1012 = vld [vmem:[%s5 + $0x30] sm:$0xff]
        %v1013 = vld [vmem:[%s5 + $0x38] sm:$0xff]
        %v1014 = vld [vmem:[%s5 + $0x40] sm:$0xff]
        %v1015 = vld [vmem:[%s5 + $0x48] sm:$0xff]
        %v1016 = vld [vmem:[%s5 + $0x50] sm:$0xff]
        %v1017 = vld [vmem:[%s5 + $0x58] sm:$0xff]
        %v1018 = vld [vmem:[%s5 + $0x60] sm:$0xff]
        %v1019 = vld [vmem:[%s5 + $0x68] sm:$0xff]
        %v1020 = vld [vmem:[%s5 + $0x70] sm:$0xff]
        %v1021 = vld [vmem:[%s5 + $0x78] sm:$0xff]
        %v1022 = vld [vmem:[%s5 + $0x80] sm:$0xff]
        %v1023 = vld [vmem:[%s5 + $0x88] sm:$0xff]
        %v1024 = vld [vmem:[%s5 + $0x90] sm:$0xff]
        %v1025 = vld [vmem:[%s5 + $0x98] sm:$0xff]
        %v1026 = vld [vmem:[%s5 + $0xa0] sm:$0xff]
        %v1027 = vld [vmem:[%s5 + $0xa8] sm:$0xff]
        %v1028 = vld [vmem:[%s5 + $0xb0] sm:$0xff]
        %v1029 = vld [vmem:[%s5 + $0xb8] sm:$0xff]
        %v1030 = vld [vmem:[%s5 + $0xc0] sm:$0xff]
        %v1031 = vld [vmem:[%s5 + $0xc8] sm:$0xff]
        %v1032 = vld [vmem:[%s5 + $0xd0] sm:$0xff]
        %v1033 = vld [vmem:[%s5 + $0xd8] sm:$0xff]
        %v1034 = vld [vmem:[%s5 + $0xe0] sm:$0xff]
        %v1035 = vld [vmem:[%s5 + $0xe8] sm:$0xff]
        %v1036 = vld [vmem:[%s5 + $0xf0] sm:$0xff]
        %v1037 = vld [vmem:[%s5 + $0xf8] sm:$0xff]
        %v1038 = vld [vmem:[%s341] sm:$0xff]
        %v1039 = vld [vmem:[%s341 + $0x8] sm:$0xff]
        %v1041 = vsel %vm355, %v1006, 0
        %v1044 = vsel %vm355, %v1007, 0
        %v1047 = vsel %vm355, %v1008, 0
        %v1050 = vsel %vm355, %v1009, 0
        %v1053 = vsel %vm355, %v1010, 0
        %v1056 = vsel %vm355, %v1011, 0
        %v1059 = vsel %vm355, %v1012, 0
        %v1062 = vsel %vm355, %v1013, 0
        %v1065 = vsel %vm355, %v1014, 0
        %v1068 = vsel %vm355, %v1015, 0
        %v1071 = vsel %vm355, %v1016, 0
        %v1074 = vsel %vm355, %v1017, 0
        %v1077 = vsel %vm355, %v1018, 0
        %v1080 = vsel %vm355, %v1019, 0
        %v1083 = vsel %vm355, %v1020, 0
        %v1086 = vsel %vm355, %v1021, 0
        %v1089 = vsel %vm355, %v1022, 0
        %v1092 = vsel %vm355, %v1023, 0
        %v1095 = vsel %vm355, %v1024, 0
        %v1098 = vsel %vm355, %v1025, 0
        %v1101 = vsel %vm355, %v1026, 0
        %v1104 = vsel %vm355, %v1027, 0
        %v1107 = vsel %vm355, %v1028, 0
        %v1110 = vsel %vm355, %v1029, 0
        %v1113 = vsel %vm355, %v1030, 0
        %v1116 = vsel %vm355, %v1031, 0
        %v1119 = vsel %vm355, %v1032, 0
        %v1122 = vsel %vm355, %v1033, 0
        %v1125 = vsel %vm355, %v1034, 0
        %v1128 = vsel %vm355, %v1035, 0
        %v1131 = vsel %vm355, %v1036, 0
        %v1134 = vsel %vm355, %v1037, 0
        %1136 = vmatprep.subr.mxu0 %v1039
        %1137 = vmatpush1.msra.mxu0 %v1038
        %1138 = vmatprep.subr.mxu0 0.0
        %1139 = vmatpush1.msra.mxu0 0.0
        %1140 = vmatprep.subr.mxu0 0.0
        %1141 = vmatpush1.msra.mxu0 0.0
        %1142 = vmatprep.subr.mxu0 0.0
        %1143 = vmatpush1.msra.mxu0 0.0
        %1144 = vmatprep.subr.mxu0 0.0
        %1145 = vmatpush1.msra.mxu0 0.0
        %1146 = vmatprep.subr.mxu0 0.0
        %1147 = vmatpush1.msra.mxu0 0.0
        %1148 = vmatprep.subr.mxu0 0.0
        %1149 = vmatpush1.msra.mxu0 0.0
        %1150 = vmatprep.subr.mxu0 0.0
        %1151 = vmatpush1.msra.mxu0 0.0
        %1152 = vmatprep.subr.mxu0 0.0
        %1153 = vmatpush1.msra.mxu0 0.0
        %1154 = vmatprep.subr.mxu0 0.0
        %1155 = vmatpush1.msra.mxu0 0.0
        %1156 = vmatprep.subr.mxu0 0.0
        %1157 = vmatpush1.msra.mxu0 0.0
        %1158 = vmatprep.subr.mxu0 0.0
        %1159 = vmatpush1.msra.mxu0 0.0
        %1160 = vmatprep.subr.mxu0 0.0
        %1161 = vmatpush1.msra.mxu0 0.0
        %1162 = vmatprep.subr.mxu0 0.0
        %1163 = vmatpush1.msra.mxu0 0.0
        %1164 = vmatprep.subr.mxu0 0.0
        %1165 = vmatpush1.msra.mxu0 0.0
        %1166 = vmatprep.subr.mxu0 0.0
        %1167 = vmatpush1.msra.mxu0 0.0
        %1168 = vmatprep.subr.mxu0 0.0
        %1169 = vmatpush1.msra.mxu0 0.0
        %1170 = vmatprep.subr.mxu0 0.0
        %1171 = vmatpush1.msra.mxu0 0.0
        %1172 = vmatprep.subr.mxu0 0.0
        %1173 = vmatpush1.msra.mxu0 0.0
        %1174 = vmatprep.subr.mxu0 0.0
        %1175 = vmatpush1.msra.mxu0 0.0
        %1176 = vmatprep.subr.mxu0 0.0
        %1177 = vmatpush1.msra.mxu0 0.0
        %1178 = vmatprep.subr.mxu0 0.0
        %1179 = vmatpush1.msra.mxu0 0.0
        %1180 = vmatprep.subr.mxu0 0.0
        %1181 = vmatpush1.msra.mxu0 0.0
        %1182 = vmatprep.subr.mxu0 0.0
        %1183 = vmatpush1.msra.mxu0 0.0
        %1184 = vmatprep.subr.mxu0 0.0
        %1185 = vmatpush1.msra.mxu0 0.0
        %1186 = vmatprep.subr.mxu0 0.0
        %1187 = vmatpush1.msra.mxu0 0.0
        %1188 = vmatprep.subr.mxu0 0.0
        %1189 = vmatpush1.msra.mxu0 0.0
        %1190 = vmatprep.subr.mxu0 0.0
        %1191 = vmatpush1.msra.mxu0 0.0
        %1192 = vmatprep.subr.mxu0 0.0
        %1193 = vmatpush1.msra.mxu0 0.0
        %1194 = vmatprep.subr.mxu0 0.0
        %1195 = vmatpush1.msra.mxu0 0.0
        %1196 = vmatprep.subr.mxu0 0.0
        %1197 = vmatpush1.msra.mxu0 0.0
        %1198 = vmatprep.subr.mxu0 0.0
        %1199 = vmatpush1.msra.mxu0 0.0
        %1200 = vmatprep.mubr.f32.mxu0 0.0
        %1201 = vmatmul.mubr.f32.gmra.mrb[0].mxu0 %v1041
        %v1202 = vpop.f32.mrb[0].mxu0
        %v1203 = vadd.f32 0.0, %v1202
        %v1204 = vpop.f32.mrb[0].mxu0
        %v1205 = vadd.f32 0.0, %v1204
        %1206 = vmatprep.mubr.f32.mxu0 0.0
        %1207 = vmatmul.mubr.f32.gmra.mrb[0].mxu0 %v1044
        %v1208 = vpop.f32.mrb[0].mxu0
        %v1209 = vadd.f32 0.0, %v1208
        %v1210 = vpop.f32.mrb[0].mxu0
        %v1211 = vadd.f32 0.0, %v1210
        %1212 = vmatprep.mubr.f32.mxu0 0.0
        %1213 = vmatmul.mubr.f32.gmra.mrb[0].mxu0 %v1047
        %v1214 = vpop.f32.mrb[0].mxu0
        %v1215 = vadd.f32 0.0, %v1214
        %v1216 = vpop.f32.mrb[0].mxu0
        %v1217 = vadd.f32 0.0, %v1216
        %1218 = vmatprep.mubr.f32.mxu0 0.0
        %1219 = vmatmul.mubr.f32.gmra.mrb[0].mxu0 %v1050
        %v1220 = vpop.f32.mrb[0].mxu0
        %v1221 = vadd.f32 0.0, %v1220
        %v1222 = vpop.f32.mrb[0].mxu0
        %v1223 = vadd.f32 0.0, %v1222
        %1224 = vmatprep.mubr.f32.mxu0 0.0
        %1225 = vmatmul.mubr.f32.gmra.mrb[0].mxu0 %v1053
        %v1226 = vpop.f32.mrb[0].mxu0
        %v1227 = vadd.f32 0.0, %v1226
        %v1228 = vpop.f32.mrb[0].mxu0
        %v1229 = vadd.f32 0.0, %v1228
        %1230 = vmatprep.mubr.f32.mxu0 0.0
        %1231 = vmatmul.mubr.f32.gmra.mrb[0].mxu0 %v1056
        %v1232 = vpop.f32.mrb[0].mxu0
        %v1233 = vadd.f32 0.0, %v1232
        %v1234 = vpop.f32.mrb[0].mxu0
        %v1235 = vadd.f32 0.0, %v1234
        %1236 = vmatprep.mubr.f32.mxu0 0.0
        %1237 = vmatmul.mubr.f32.gmra.mrb[0].mxu0 %v1059
        %v1238 = vpop.f32.mrb[0].mxu0
        %v1239 = vadd.f32 0.0, %v1238
        %v1240 = vpop.f32.mrb[0].mxu0
        %v1241 = vadd.f32 0.0, %v1240
        %1242 = vmatprep.mubr.f32.mxu0 0.0
        %1243 = vmatmul.mubr.f32.gmra.mrb[0].mxu0 %v1062
        %v1244 = vpop.f32.mrb[0].mxu0
        %v1245 = vadd.f32 0.0, %v1244
        %v1246 = vpop.f32.mrb[0].mxu0
        %v1247 = vadd.f32 0.0, %v1246
        %1248 = vmatprep.mubr.f32.mxu0 0.0
        %1249 = vmatmul.mubr.f32.gmra.mrb[0].mxu0 %v1065
        %v1250 = vpop.f32.mrb[0].mxu0
        %v1251 = vadd.f32 0.0, %v1250
        %v1252 = vpop.f32.mrb[0].mxu0
        %v1253 = vadd.f32 0.0, %v1252
        %1254 = vmatprep.mubr.f32.mxu0 0.0
        %1255 = vmatmul.mubr.f32.gmra.mrb[0].mxu0 %v1068
        %v1256 = vpop.f32.mrb[0].mxu0
        %v1257 = vadd.f32 0.0, %v1256
        %v1258 = vpop.f32.mrb[0].mxu0
        %v1259 = vadd.f32 0.0, %v1258
        %1260 = vmatprep.mubr.f32.mxu0 0.0
        %1261 = vmatmul.mubr.f32.gmra.mrb[0].mxu0 %v1071
        %v1262 = vpop.f32.mrb[0].mxu0
        %v1263 = vadd.f32 0.0, %v1262
        %v1264 = vpop.f32.mrb[0].mxu0
        %v1265 = vadd.f32 0.0, %v1264
        %1266 = vmatprep.mubr.f32.mxu0 0.0
        %1267 = vmatmul.mubr.f32.gmra.mrb[0].mxu0 %v1074
        %v1268 = vpop.f32.mrb[0].mxu0
        %v1269 = vadd.f32 0.0, %v1268
        %v1270 = vpop.f32.mrb[0].mxu0
        %v1271 = vadd.f32 0.0, %v1270
        %1272 = vmatprep.mubr.f32.mxu0 0.0
        %1273 = vmatmul.mubr.f32.gmra.mrb[0].mxu0 %v1077
        %v1274 = vpop.f32.mrb[0].mxu0
        %v1275 = vadd.f32 0.0, %v1274
        %v1276 = vpop.f32.mrb[0].mxu0
        %v1277 = vadd.f32 0.0, %v1276
        %1278 = vmatprep.mubr.f32.mxu0 0.0
        %1279 = vmatmul.mubr.f32.gmra.mrb[0].mxu0 %v1080
        %v1280 = vpop.f32.mrb[0].mxu0
        %v1281 = vadd.f32 0.0, %v1280
        %v1282 = vpop.f32.mrb[0].mxu0
        %v1283 = vadd.f32 0.0, %v1282
        %1284 = vmatprep.mubr.f32.mxu0 0.0
        %1285 = vmatmul.mubr.f32.gmra.mrb[0].mxu0 %v1083
        %v1286 = vpop.f32.mrb[0].mxu0
        %v1287 = vadd.f32 0.0, %v1286
        %v1288 = vpop.f32.mrb[0].mxu0
        %v1289 = vadd.f32 0.0, %v1288
        %1290 = vmatprep.mubr.f32.mxu0 0.0
        %1291 = vmatmul.mubr.f32.gmra.mrb[0].mxu0 %v1086
        %v1292 = vpop.f32.mrb[0].mxu0
        %v1293 = vadd.f32 0.0, %v1292
        %v1294 = vpop.f32.mrb[0].mxu0
        %v1295 = vadd.f32 0.0, %v1294
        %1296 = vmatprep.mubr.f32.mxu0 0.0
        %1297 = vmatmul.mubr.f32.gmra.mrb[0].mxu0 %v1089
        %v1298 = vpop.f32.mrb[0].mxu0
        %v1299 = vadd.f32 0.0, %v1298
        %v1300 = vpop.f32.mrb[0].mxu0
        %v1301 = vadd.f32 0.0, %v1300
        %1302 = vmatprep.mubr.f32.mxu0 0.0
        %1303 = vmatmul.mubr.f32.gmra.mrb[0].mxu0 %v1092
        %v1304 = vpop.f32.mrb[0].mxu0
        %v1305 = vadd.f32 0.0, %v1304
        %v1306 = vpop.f32.mrb[0].mxu0
        %v1307 = vadd.f32 0.0, %v1306
        %1308 = vmatprep.mubr.f32.mxu0 0.0
        %1309 = vmatmul.mubr.f32.gmra.mrb[0].mxu0 %v1095
        %v1310 = vpop.f32.mrb[0].mxu0
        %v1311 = vadd.f32 0.0, %v1310
        %v1312 = vpop.f32.mrb[0].mxu0
        %v1313 = vadd.f32 0.0, %v1312
        %1314 = vmatprep.mubr.f32.mxu0 0.0
        %1315 = vmatmul.mubr.f32.gmra.mrb[0].mxu0 %v1098
        %v1316 = vpop.f32.mrb[0].mxu0
        %v1317 = vadd.f32 0.0, %v1316
        %v1318 = vpop.f32.mrb[0].mxu0
        %v1319 = vadd.f32 0.0, %v1318
        %1320 = vmatprep.mubr.f32.mxu0 0.0
        %1321 = vmatmul.mubr.f32.gmra.mrb[0].mxu0 %v1101
        %v1322 = vpop.f32.mrb[0].mxu0
        %v1323 = vadd.f32 0.0, %v1322
        %v1324 = vpop.f32.mrb[0].mxu0
        %v1325 = vadd.f32 0.0, %v1324
        %1326 = vmatprep.mubr.f32.mxu0 0.0
        %1327 = vmatmul.mubr.f32.gmra.mrb[0].mxu0 %v1104
        %v1328 = vpop.f32.mrb[0].mxu0
        %v1329 = vadd.f32 0.0, %v1328
        %v1330 = vpop.f32.mrb[0].mxu0
        %v1331 = vadd.f32 0.0, %v1330
        %1332 = vmatprep.mubr.f32.mxu0 0.0
        %1333 = vmatmul.mubr.f32.gmra.mrb[0].mxu0 %v1107
        %v1334 = vpop.f32.mrb[0].mxu0
        %v1335 = vadd.f32 0.0, %v1334
        %v1336 = vpop.f32.mrb[0].mxu0
        %v1337 = vadd.f32 0.0, %v1336
        %1338 = vmatprep.mubr.f32.mxu0 0.0
        %1339 = vmatmul.mubr.f32.gmra.mrb[0].mxu0 %v1110
        %v1340 = vpop.f32.mrb[0].mxu0
        %v1341 = vadd.f32 0.0, %v1340
        %v1342 = vpop.f32.mrb[0].mxu0
        %v1343 = vadd.f32 0.0, %v1342
        %1344 = vmatprep.mubr.f32.mxu0 0.0
        %1345 = vmatmul.mubr.f32.gmra.mrb[0].mxu0 %v1113
        %v1346 = vpop.f32.mrb[0].mxu0
        %v1347 = vadd.f32 0.0, %v1346
        %v1348 = vpop.f32.mrb[0].mxu0
        %v1349 = vadd.f32 0.0, %v1348
        %1350 = vmatprep.mubr.f32.mxu0 0.0
        %1351 = vmatmul.mubr.f32.gmra.mrb[0].mxu0 %v1116
        %v1352 = vpop.f32.mrb[0].mxu0
        %v1353 = vadd.f32 0.0, %v1352
        %v1354 = vpop.f32.mrb[0].mxu0
        %v1355 = vadd.f32 0.0, %v1354
        %1356 = vmatprep.mubr.f32.mxu0 0.0
        %1357 = vmatmul.mubr.f32.gmra.mrb[0].mxu0 %v1119
        %v1358 = vpop.f32.mrb[0].mxu0
        %v1359 = vadd.f32 0.0, %v1358
        %v1360 = vpop.f32.mrb[0].mxu0
        %v1361 = vadd.f32 0.0, %v1360
        %1362 = vmatprep.mubr.f32.mxu0 0.0
        %1363 = vmatmul.mubr.f32.gmra.mrb[0].mxu0 %v1122
        %v1364 = vpop.f32.mrb[0].mxu0
        %v1365 = vadd.f32 0.0, %v1364
        %v1366 = vpop.f32.mrb[0].mxu0
        %v1367 = vadd.f32 0.0, %v1366
        %1368 = vmatprep.mubr.f32.mxu0 0.0
        %1369 = vmatmul.mubr.f32.gmra.mrb[0].mxu0 %v1125
        %v1370 = vpop.f32.mrb[0].mxu0
        %v1371 = vadd.f32 0.0, %v1370
        %v1372 = vpop.f32.mrb[0].mxu0
        %v1373 = vadd.f32 0.0, %v1372
        %1374 = vmatprep.mubr.f32.mxu0 0.0
        %1375 = vmatmul.mubr.f32.gmra.mrb[0].mxu0 %v1128
        %v1376 = vpop.f32.mrb[0].mxu0
        %v1377 = vadd.f32 0.0, %v1376
        %v1378 = vpop.f32.mrb[0].mxu0
        %v1379 = vadd.f32 0.0, %v1378
        %1380 = vmatprep.mubr.f32.mxu0 0.0
        %1381 = vmatmul.mubr.f32.gmra.mrb[0].mxu0 %v1131
        %v1382 = vpop.f32.mrb[0].mxu0
        %v1383 = vadd.f32 0.0, %v1382
        %v1384 = vpop.f32.mrb[0].mxu0
        %v1385 = vadd.f32 0.0, %v1384
        %1386 = vmatprep.mubr.f32.mxu0 0.0
        %1387 = vmatmul.mubr.f32.gmra.mrb[0].mxu0 %v1134
        %v1388 = vpop.f32.mrb[0].mxu0
        %v1389 = vadd.f32 0.0, %v1388
        %v1390 = vpop.f32.mrb[0].mxu0
        %v1391 = vadd.f32 0.0, %v1390
        %1392 = vdwg.mxu0
        %vm1393 = vcmask 31744
        %v1395 = vsel %vm1393, %v974, 0
        %v1398 = vsel %vm1393, %v975, 0
        %v1401 = vsel %vm1393, %v976, 0
        %v1404 = vsel %vm1393, %v977, 0
        %v1407 = vsel %vm1393, %v978, 0
        %v1410 = vsel %vm1393, %v979, 0
        %v1413 = vsel %vm1393, %v980, 0
        %v1416 = vsel %vm1393, %v981, 0
        %v1419 = vsel %vm1393, %v982, 0
        %v1422 = vsel %vm1393, %v983, 0
        %v1425 = vsel %vm1393, %v984, 0
        %v1428 = vsel %vm1393, %v985, 0
        %v1431 = vsel %vm1393, %v986, 0
        %v1434 = vsel %vm1393, %v987, 0
        %v1437 = vsel %vm1393, %v988, 0
        %v1440 = vsel %vm1393, %v989, 0
        %v1443 = vsel %vm1393, %v990, 0
        %v1446 = vsel %vm1393, %v991, 0
        %v1449 = vsel %vm1393, %v992, 0
        %v1452 = vsel %vm1393, %v993, 0
        %v1455 = vsel %vm1393, %v994, 0
        %v1458 = vsel %vm1393, %v995, 0
        %v1461 = vsel %vm1393, %v996, 0
        %v1464 = vsel %vm1393, %v997, 0
        %v1467 = vsel %vm1393, %v998, 0
        %v1470 = vsel %vm1393, %v999, 0
        %v1473 = vsel %vm1393, %v1000, 0
        %v1476 = vsel %vm1393, %v1001, 0
        %v1479 = vsel %vm1393, %v1002, 0
        %v1482 = vsel %vm1393, %v1003, 0
        %v1485 = vsel %vm1393, %v1004, 0
        %v1488 = vsel %vm1393, %v1005, 0
        %vm1490 = vcmask 1043456
        %v1492 = vsel %vm1490, %v966, 0
        %v1495 = vsel %vm1490, %v973, 0
        %1497 = vmatprep.subr.mxu0 %v1495
        %1498 = vmatpush1.msra.mxu0 %v1492
        %1499 = vmatprep.subr.mxu0 0.0
        %1500 = vmatpush1.msra.mxu0 0.0
        %1501 = vmatprep.subr.mxu0 0.0
        %1502 = vmatpush1.msra.mxu0 0.0
        %1503 = vmatprep.subr.mxu0 0.0
        %1504 = vmatpush1.msra.mxu0 0.0
        %1505 = vmatprep.subr.mxu0 0.0
        %1506 = vmatpush1.msra.mxu0 0.0
        %1507 = vmatprep.subr.mxu0 0.0
        %1508 = vmatpush1.msra.mxu0 0.0
        %1509 = vmatprep.subr.mxu0 0.0
        %1510 = vmatpush1.msra.mxu0 0.0
        %1511 = vmatprep.subr.mxu0 0.0
        %1512 = vmatpush1.msra.mxu0 0.0
        %1513 = vmatprep.subr.mxu0 0.0
        %1514 = vmatpush1.msra.mxu0 0.0
        %1515 = vmatprep.subr.mxu0 0.0
        %1516 = vmatpush1.msra.mxu0 0.0
        %1517 = vmatprep.subr.mxu0 0.0
        %1518 = vmatpush1.msra.mxu0 0.0
        %1519 = vmatprep.subr.mxu0 0.0
        %1520 = vmatpush1.msra.mxu0 0.0
        %1521 = vmatprep.subr.mxu0 0.0
        %1522 = vmatpush1.msra.mxu0 0.0
        %1523 = vmatprep.subr.mxu0 0.0
        %1524 = vmatpush1.msra.mxu0 0.0
        %1525 = vmatprep.subr.mxu0 0.0
        %1526 = vmatpush1.msra.mxu0 0.0
        %1527 = vmatprep.subr.mxu0 0.0
        %1528 = vmatpush1.msra.mxu0 0.0
        %1529 = vmatprep.subr.mxu0 0.0
        %1530 = vmatpush1.msra.mxu0 0.0
        %1531 = vmatprep.subr.mxu0 0.0
        %1532 = vmatpush1.msra.mxu0 0.0
        %1533 = vmatprep.subr.mxu0 0.0
        %1534 = vmatpush1.msra.mxu0 0.0
        %1535 = vmatprep.subr.mxu0 0.0
        %1536 = vmatpush1.msra.mxu0 0.0
        %1537 = vmatprep.subr.mxu0 0.0
        %1538 = vmatpush1.msra.mxu0 0.0
        %1539 = vmatprep.subr.mxu0 0.0
        %1540 = vmatpush1.msra.mxu0 0.0
        %1541 = vmatprep.subr.mxu0 0.0
        %1542 = vmatpush1.msra.mxu0 0.0
        %1543 = vmatprep.subr.mxu0 0.0
        %1544 = vmatpush1.msra.mxu0 0.0
        %1545 = vmatprep.subr.mxu0 0.0
        %1546 = vmatpush1.msra.mxu0 0.0
        %1547 = vmatprep.subr.mxu0 0.0
        %1548 = vmatpush1.msra.mxu0 0.0
        %1549 = vmatprep.subr.mxu0 0.0
        %1550 = vmatpush1.msra.mxu0 0.0
        %1551 = vmatprep.subr.mxu0 0.0
        %1552 = vmatpush1.msra.mxu0 0.0
        %1553 = vmatprep.subr.mxu0 0.0
        %1554 = vmatpush1.msra.mxu0 0.0
        %1555 = vmatprep.subr.mxu0 0.0
        %1556 = vmatpush1.msra.mxu0 0.0
        %1557 = vmatprep.subr.mxu0 0.0
        %1558 = vmatpush1.msra.mxu0 0.0
        %1559 = vmatprep.subr.mxu0 0.0
        %1560 = vmatpush1.msra.mxu0 0.0
        %1561 = vmatprep.mubr.f32.mxu0 0.0
        %1562 = vmatmul.mubr.f32.gmra.mrb[0].mxu0 %v1395
        %v1563 = vpop.f32.mrb[0].mxu0
        %v1564 = vadd.f32 %v1203, %v1563
        %v1565 = vpop.f32.mrb[0].mxu0
        %v1566 = vadd.f32 %v1205, %v1565
        %1567 = vmatprep.mubr.f32.mxu0 0.0
        %1568 = vmatmul.mubr.f32.gmra.mrb[0].mxu0 %v1398
        %v1569 = vpop.f32.mrb[0].mxu0
        %v1570 = vadd.f32 %v1209, %v1569
        %v1571 = vpop.f32.mrb[0].mxu0
        %v1572 = vadd.f32 %v1211, %v1571
        %1573 = vmatprep.mubr.f32.mxu0 0.0
        %1574 = vmatmul.mubr.f32.gmra.mrb[0].mxu0 %v1401
        %v1575 = vpop.f32.mrb[0].mxu0
        %v1576 = vadd.f32 %v1215, %v1575
        %v1577 = vpop.f32.mrb[0].mxu0
        %v1578 = vadd.f32 %v1217, %v1577
        %1579 = vmatprep.mubr.f32.mxu0 0.0
        %1580 = vmatmul.mubr.f32.gmra.mrb[0].mxu0 %v1404
        %v1581 = vpop.f32.mrb[0].mxu0
        %v1582 = vadd.f32 %v1221, %v1581
        %v1583 = vpop.f32.mrb[0].mxu0
        %v1584 = vadd.f32 %v1223, %v1583
        %1585 = vmatprep.mubr.f32.mxu0 0.0
        %1586 = vmatmul.mubr.f32.gmra.mrb[0].mxu0 %v1407
        %v1587 = vpop.f32.mrb[0].mxu0
        %v1588 = vadd.f32 %v1227, %v1587
        %v1589 = vpop.f32.mrb[0].mxu0
        %v1590 = vadd.f32 %v1229, %v1589
        %1591 = vmatprep.mubr.f32.mxu0 0.0
        %1592 = vmatmul.mubr.f32.gmra.mrb[0].mxu0 %v1410
        %v1593 = vpop.f32.mrb[0].mxu0
        %v1594 = vadd.f32 %v1233, %v1593
        %v1595 = vpop.f32.mrb[0].mxu0
        %v1596 = vadd.f32 %v1235, %v1595
        %1597 = vmatprep.mubr.f32.mxu0 0.0
        %1598 = vmatmul.mubr.f32.gmra.mrb[0].mxu0 %v1413
        %v1599 = vpop.f32.mrb[0].mxu0
        %v1600 = vadd.f32 %v1239, %v1599
        %v1601 = vpop.f32.mrb[0].mxu0
        %v1602 = vadd.f32 %v1241, %v1601
        %1603 = vmatprep.mubr.f32.mxu0 0.0
        %1604 = vmatmul.mubr.f32.gmra.mrb[0].mxu0 %v1416
        %v1605 = vpop.f32.mrb[0].mxu0
        %v1606 = vadd.f32 %v1245, %v1605
        %v1607 = vpop.f32.mrb[0].mxu0
        %v1608 = vadd.f32 %v1247, %v1607
        %1609 = vmatprep.mubr.f32.mxu0 0.0
        %1610 = vmatmul.mubr.f32.gmra.mrb[0].mxu0 %v1419
        %v1611 = vpop.f32.mrb[0].mxu0
        %v1612 = vadd.f32 %v1251, %v1611
        %v1613 = vpop.f32.mrb[0].mxu0
        %v1614 = vadd.f32 %v1253, %v1613
        %1615 = vmatprep.mubr.f32.mxu0 0.0
        %1616 = vmatmul.mubr.f32.gmra.mrb[0].mxu0 %v1422
        %v1617 = vpop.f32.mrb[0].mxu0
        %v1618 = vadd.f32 %v1257, %v1617
        %v1619 = vpop.f32.mrb[0].mxu0
        %v1620 = vadd.f32 %v1259, %v1619
        %1621 = vmatprep.mubr.f32.mxu0 0.0
        %1622 = vmatmul.mubr.f32.gmra.mrb[0].mxu0 %v1425
        %v1623 = vpop.f32.mrb[0].mxu0
        %v1624 = vadd.f32 %v1263, %v1623
        %v1625 = vpop.f32.mrb[0].mxu0
        %v1626 = vadd.f32 %v1265, %v1625
        %1627 = vmatprep.mubr.f32.mxu0 0.0
        %1628 = vmatmul.mubr.f32.gmra.mrb[0].mxu0 %v1428
        %v1629 = vpop.f32.mrb[0].mxu0
        %v1630 = vadd.f32 %v1269, %v1629
        %v1631 = vpop.f32.mrb[0].mxu0
        %v1632 = vadd.f32 %v1271, %v1631
        %1633 = vmatprep.mubr.f32.mxu0 0.0
        %1634 = vmatmul.mubr.f32.gmra.mrb[0].mxu0 %v1431
        %v1635 = vpop.f32.mrb[0].mxu0
        %v1636 = vadd.f32 %v1275, %v1635
        %v1637 = vpop.f32.mrb[0].mxu0
        %v1638 = vadd.f32 %v1277, %v1637
        %1639 = vmatprep.mubr.f32.mxu0 0.0
        %1640 = vmatmul.mubr.f32.gmra.mrb[0].mxu0 %v1434
        %v1641 = vpop.f32.mrb[0].mxu0
        %v1642 = vadd.f32 %v1281, %v1641
        %v1643 = vpop.f32.mrb[0].mxu0
        %v1644 = vadd.f32 %v1283, %v1643
        %1645 = vmatprep.mubr.f32.mxu0 0.0
        %1646 = vmatmul.mubr.f32.gmra.mrb[0].mxu0 %v1437
        %v1647 = vpop.f32.mrb[0].mxu0
        %v1648 = vadd.f32 %v1287, %v1647
        %v1649 = vpop.f32.mrb[0].mxu0
        %v1650 = vadd.f32 %v1289, %v1649
        %1651 = vmatprep.mubr.f32.mxu0 0.0
        %1652 = vmatmul.mubr.f32.gmra.mrb[0].mxu0 %v1440
        %v1653 = vpop.f32.mrb[0].mxu0
        %v1654 = vadd.f32 %v1293, %v1653
        %v1655 = vpop.f32.mrb[0].mxu0
        %v1656 = vadd.f32 %v1295, %v1655
        %1657 = vmatprep.mubr.f32.mxu0 0.0
        %1658 = vmatmul.mubr.f32.gmra.mrb[0].mxu0 %v1443
        %v1659 = vpop.f32.mrb[0].mxu0
        %v1660 = vadd.f32 %v1299, %v1659
        %v1661 = vpop.f32.mrb[0].mxu0
        %v1662 = vadd.f32 %v1301, %v1661
        %1663 = vmatprep.mubr.f32.mxu0 0.0
        %1664 = vmatmul.mubr.f32.gmra.mrb[0].mxu0 %v1446
        %v1665 = vpop.f32.mrb[0].mxu0
        %v1666 = vadd.f32 %v1305, %v1665
        %v1667 = vpop.f32.mrb[0].mxu0
        %v1668 = vadd.f32 %v1307, %v1667
        %1669 = vmatprep.mubr.f32.mxu0 0.0
        %1670 = vmatmul.mubr.f32.gmra.mrb[0].mxu0 %v1449
        %v1671 = vpop.f32.mrb[0].mxu0
        %v1672 = vadd.f32 %v1311, %v1671
        %v1673 = vpop.f32.mrb[0].mxu0
        %v1674 = vadd.f32 %v1313, %v1673
        %1675 = vmatprep.mubr.f32.mxu0 0.0
        %1676 = vmatmul.mubr.f32.gmra.mrb[0].mxu0 %v1452
        %v1677 = vpop.f32.mrb[0].mxu0
        %v1678 = vadd.f32 %v1317, %v1677
        %v1679 = vpop.f32.mrb[0].mxu0
        %v1680 = vadd.f32 %v1319, %v1679
        %1681 = vmatprep.mubr.f32.mxu0 0.0
        %1682 = vmatmul.mubr.f32.gmra.mrb[0].mxu0 %v1455
        %v1683 = vpop.f32.mrb[0].mxu0
        %v1684 = vadd.f32 %v1323, %v1683
        %v1685 = vpop.f32.mrb[0].mxu0
        %v1686 = vadd.f32 %v1325, %v1685
        %1687 = vmatprep.mubr.f32.mxu0 0.0
        %1688 = vmatmul.mubr.f32.gmra.mrb[0].mxu0 %v1458
        %v1689 = vpop.f32.mrb[0].mxu0
        %v1690 = vadd.f32 %v1329, %v1689
        %v1691 = vpop.f32.mrb[0].mxu0
        %v1692 = vadd.f32 %v1331, %v1691
        %1693 = vmatprep.mubr.f32.mxu0 0.0
        %1694 = vmatmul.mubr.f32.gmra.mrb[0].mxu0 %v1461
        %v1695 = vpop.f32.mrb[0].mxu0
        %v1696 = vadd.f32 %v1335, %v1695
        %v1697 = vpop.f32.mrb[0].mxu0
        %v1698 = vadd.f32 %v1337, %v1697
        %1699 = vmatprep.mubr.f32.mxu0 0.0
        %1700 = vmatmul.mubr.f32.gmra.mrb[0].mxu0 %v1464
        %v1701 = vpop.f32.mrb[0].mxu0
        %v1702 = vadd.f32 %v1341, %v1701
        %v1703 = vpop.f32.mrb[0].mxu0
        %v1704 = vadd.f32 %v1343, %v1703
        %1705 = vmatprep.mubr.f32.mxu0 0.0
        %1706 = vmatmul.mubr.f32.gmra.mrb[0].mxu0 %v1467
        %v1707 = vpop.f32.mrb[0].mxu0
        %v1708 = vadd.f32 %v1347, %v1707
        %v1709 = vpop.f32.mrb[0].mxu0
        %v1710 = vadd.f32 %v1349, %v1709
        %1711 = vmatprep.mubr.f32.mxu0 0.0
        %1712 = vmatmul.mubr.f32.gmra.mrb[0].mxu0 %v1470
        %v1713 = vpop.f32.mrb[0].mxu0
        %v1714 = vadd.f32 %v1353, %v1713
        %v1715 = vpop.f32.mrb[0].mxu0
        %v1716 = vadd.f32 %v1355, %v1715
        %1717 = vmatprep.mubr.f32.mxu0 0.0
        %1718 = vmatmul.mubr.f32.gmra.mrb[0].mxu0 %v1473
        %v1719 = vpop.f32.mrb[0].mxu0
        %v1720 = vadd.f32 %v1359, %v1719
        %v1721 = vpop.f32.mrb[0].mxu0
        %v1722 = vadd.f32 %v1361, %v1721
        %1723 = vmatprep.mubr.f32.mxu0 0.0
        %1724 = vmatmul.mubr.f32.gmra.mrb[0].mxu0 %v1476
        %v1725 = vpop.f32.mrb[0].mxu0
        %v1726 = vadd.f32 %v1365, %v1725
        %v1727 = vpop.f32.mrb[0].mxu0
        %v1728 = vadd.f32 %v1367, %v1727
        %1729 = vmatprep.mubr.f32.mxu0 0.0
        %1730 = vmatmul.mubr.f32.gmra.mrb[0].mxu0 %v1479
        %v1731 = vpop.f32.mrb[0].mxu0
        %v1732 = vadd.f32 %v1371, %v1731
        %v1733 = vpop.f32.mrb[0].mxu0
        %v1734 = vadd.f32 %v1373, %v1733
        %1735 = vmatprep.mubr.f32.mxu0 0.0
        %1736 = vmatmul.mubr.f32.gmra.mrb[0].mxu0 %v1482
        %v1737 = vpop.f32.mrb[0].mxu0
        %v1738 = vadd.f32 %v1377, %v1737
        %v1739 = vpop.f32.mrb[0].mxu0
        %v1740 = vadd.f32 %v1379, %v1739
        %1741 = vmatprep.mubr.f32.mxu0 0.0
        %1742 = vmatmul.mubr.f32.gmra.mrb[0].mxu0 %v1485
        %v1743 = vpop.f32.mrb[0].mxu0
        %v1744 = vadd.f32 %v1383, %v1743
        %v1745 = vpop.f32.mrb[0].mxu0
        %v1746 = vadd.f32 %v1385, %v1745
        %1747 = vmatprep.mubr.f32.mxu0 0.0
        %1748 = vmatmul.mubr.f32.gmra.mrb[0].mxu0 %v1488
        %v1749 = vpop.f32.mrb[0].mxu0
        %v1750 = vadd.f32 %v1389, %v1749
        %v1751 = vpop.f32.mrb[0].mxu0
        %v1752 = vadd.f32 %v1391, %v1751
        %1753 = vdwg.mxu0
        %v1754 = vld [vmem:[%s6] sm:$0xff]
        %v1755 = vld [vmem:[%s6 + $0x8] sm:$0xff]
        %v1756 = vld [vmem:[%s6 + $0x10] sm:$0xff]
        %v1757 = vld [vmem:[%s6 + $0x18] sm:$0xff]
        %v1758 = vld [vmem:[%s6 + $0x20] sm:$0xff]
        %v1759 = vld [vmem:[%s6 + $0x28] sm:$0xff]
        %v1760 = vld [vmem:[%s6 + $0x30] sm:$0xff]
        %v1761 = vld [vmem:[%s6 + $0x38] sm:$0xff]
        %v1762 = vld [vmem:[%s6 + $0x40] sm:$0xff]
        %v1763 = vld [vmem:[%s6 + $0x48] sm:$0xff]
        %v1764 = vld [vmem:[%s6 + $0x50] sm:$0xff]
        %v1765 = vld [vmem:[%s6 + $0x58] sm:$0xff]
        %v1766 = vld [vmem:[%s6 + $0x60] sm:$0xff]
        %v1767 = vld [vmem:[%s6 + $0x68] sm:$0xff]
        %v1768 = vld [vmem:[%s6 + $0x70] sm:$0xff]
        %v1769 = vld [vmem:[%s6 + $0x78] sm:$0xff]
        %v1770 = vld [vmem:[%s6 + $0x80] sm:$0xff]
        %v1771 = vld [vmem:[%s6 + $0x88] sm:$0xff]
        %v1772 = vld [vmem:[%s6 + $0x90] sm:$0xff]
        %v1773 = vld [vmem:[%s6 + $0x98] sm:$0xff]
        %v1774 = vld [vmem:[%s6 + $0xa0] sm:$0xff]
        %v1775 = vld [vmem:[%s6 + $0xa8] sm:$0xff]
        %v1776 = vld [vmem:[%s6 + $0xb0] sm:$0xff]
        %v1777 = vld [vmem:[%s6 + $0xb8] sm:$0xff]
        %v1778 = vld [vmem:[%s6 + $0xc0] sm:$0xff]
        %v1779 = vld [vmem:[%s6 + $0xc8] sm:$0xff]
        %v1780 = vld [vmem:[%s6 + $0xd0] sm:$0xff]
        %v1781 = vld [vmem:[%s6 + $0xd8] sm:$0xff]
        %v1782 = vld [vmem:[%s6 + $0xe0] sm:$0xff]
        %v1783 = vld [vmem:[%s6 + $0xe8] sm:$0xff]
        %v1784 = vld [vmem:[%s6 + $0xf0] sm:$0xff]
        %v1785 = vld [vmem:[%s6 + $0xf8] sm:$0xff]
        %1787 = vset.pattern.permute.xlu0 0
        %1788 = vperm.xlu0 %1787, %v1754
        %v1789 = vpop.permute.xlu0 %1788
        %1792 = vset.pattern.permute.xlu0 0
        %1793 = vperm.xlu0 %1792, %v1755
        %v1794 = vpop.permute.xlu0 %1793
        %1797 = vset.pattern.permute.xlu0 0
        %1798 = vperm.xlu0 %1797, %v1756
        %v1799 = vpop.permute.xlu0 %1798
        %1802 = vset.pattern.permute.xlu0 0
        %1803 = vperm.xlu0 %1802, %v1757
        %v1804 = vpop.permute.xlu0 %1803
        %1807 = vset.pattern.permute.xlu0 0
        %1808 = vperm.xlu0 %1807, %v1758
        %v1809 = vpop.permute.xlu0 %1808
        %1812 = vset.pattern.permute.xlu0 0
        %1813 = vperm.xlu0 %1812, %v1759
        %v1814 = vpop.permute.xlu0 %1813
        %1817 = vset.pattern.permute.xlu0 0
        %1818 = vperm.xlu0 %1817, %v1760
        %v1819 = vpop.permute.xlu0 %1818
        %1822 = vset.pattern.permute.xlu0 0
        %1823 = vperm.xlu0 %1822, %v1761
        %v1824 = vpop.permute.xlu0 %1823
        %1827 = vset.pattern.permute.xlu0 0
        %1828 = vperm.xlu0 %1827, %v1762
        %v1829 = vpop.permute.xlu0 %1828
        %1832 = vset.pattern.permute.xlu0 0
        %1833 = vperm.xlu0 %1832, %v1763
        %v1834 = vpop.permute.xlu0 %1833
        %1837 = vset.pattern.permute.xlu0 0
        %1838 = vperm.xlu0 %1837, %v1764
        %v1839 = vpop.permute.xlu0 %1838
        %1842 = vset.pattern.permute.xlu0 0
        %1843 = vperm.xlu0 %1842, %v1765
        %v1844 = vpop.permute.xlu0 %1843
        %1847 = vset.pattern.permute.xlu0 0
        %1848 = vperm.xlu0 %1847, %v1766
        %v1849 = vpop.permute.xlu0 %1848
        %1852 = vset.pattern.permute.xlu0 0
        %1853 = vperm.xlu0 %1852, %v1767
        %v1854 = vpop.permute.xlu0 %1853
        %1857 = vset.pattern.permute.xlu0 0
        %1858 = vperm.xlu0 %1857, %v1768
        %v1859 = vpop.permute.xlu0 %1858
        %1862 = vset.pattern.permute.xlu0 0
        %1863 = vperm.xlu0 %1862, %v1769
        %v1864 = vpop.permute.xlu0 %1863
        %1867 = vset.pattern.permute.xlu0 0
        %1868 = vperm.xlu0 %1867, %v1770
        %v1869 = vpop.permute.xlu0 %1868
        %1872 = vset.pattern.permute.xlu0 0
        %1873 = vperm.xlu0 %1872, %v1771
        %v1874 = vpop.permute.xlu0 %1873
        %1877 = vset.pattern.permute.xlu0 0
        %1878 = vperm.xlu0 %1877, %v1772
        %v1879 = vpop.permute.xlu0 %1878
        %1882 = vset.pattern.permute.xlu0 0
        %1883 = vperm.xlu0 %1882, %v1773
        %v1884 = vpop.permute.xlu0 %1883
        %1887 = vset.pattern.permute.xlu0 0
        %1888 = vperm.xlu0 %1887, %v1774
        %v1889 = vpop.permute.xlu0 %1888
        %1892 = vset.pattern.permute.xlu0 0
        %1893 = vperm.xlu0 %1892, %v1775
        %v1894 = vpop.permute.xlu0 %1893
        %1897 = vset.pattern.permute.xlu0 0
        %1898 = vperm.xlu0 %1897, %v1776
        %v1899 = vpop.permute.xlu0 %1898
        %1902 = vset.pattern.permute.xlu0 0
        %1903 = vperm.xlu0 %1902, %v1777
        %v1904 = vpop.permute.xlu0 %1903
        %1907 = vset.pattern.permute.xlu0 0
        %1908 = vperm.xlu0 %1907, %v1778
        %v1909 = vpop.permute.xlu0 %1908
        %1912 = vset.pattern.permute.xlu0 0
        %1913 = vperm.xlu0 %1912, %v1779
        %v1914 = vpop.permute.xlu0 %1913
        %1917 = vset.pattern.permute.xlu0 0
        %1918 = vperm.xlu0 %1917, %v1780
        %v1919 = vpop.permute.xlu0 %1918
        %1922 = vset.pattern.permute.xlu0 0
        %1923 = vperm.xlu0 %1922, %v1781
        %v1924 = vpop.permute.xlu0 %1923
        %1927 = vset.pattern.permute.xlu0 0
        %1928 = vperm.xlu0 %1927, %v1782
        %v1929 = vpop.permute.xlu0 %1928
        %1932 = vset.pattern.permute.xlu0 0
        %1933 = vperm.xlu0 %1932, %v1783
        %v1934 = vpop.permute.xlu0 %1933
        %1937 = vset.pattern.permute.xlu0 0
        %1938 = vperm.xlu0 %1937, %v1784
        %v1939 = vpop.permute.xlu0 %1938
        %1942 = vset.pattern.permute.xlu0 0
        %1943 = vperm.xlu0 %1942, %v1785
        %v1944 = vpop.permute.xlu0 %1943
        %v1946 = vadd.f32 %v1564, %v1789
        %v1947 = vadd.f32 %v1566, %v1789
        %v1948 = vadd.f32 %v1570, %v1794
        %v1949 = vadd.f32 %v1572, %v1794
        %v1950 = vadd.f32 %v1576, %v1799
        %v1951 = vadd.f32 %v1578, %v1799
        %v1952 = vadd.f32 %v1582, %v1804
        %v1953 = vadd.f32 %v1584, %v1804
        %v1954 = vadd.f32 %v1588, %v1809
        %v1955 = vadd.f32 %v1590, %v1809
        %v1956 = vadd.f32 %v1594, %v1814
        %v1957 = vadd.f32 %v1596, %v1814
        %v1958 = vadd.f32 %v1600, %v1819
        %v1959 = vadd.f32 %v1602, %v1819
        %v1960 = vadd.f32 %v1606, %v1824
        %v1961 = vadd.f32 %v1608, %v1824
        %v1962 = vadd.f32 %v1612, %v1829
        %v1963 = vadd.f32 %v1614, %v1829
        %v1964 = vadd.f32 %v1618, %v1834
        %v1965 = vadd.f32 %v1620, %v1834
        %v1966 = vadd.f32 %v1624, %v1839
        %v1967 = vadd.f32 %v1626, %v1839
        %v1968 = vadd.f32 %v1630, %v1844
        %v1969 = vadd.f32 %v1632, %v1844
        %v1970 = vadd.f32 %v1636, %v1849
        %v1971 = vadd.f32 %v1638, %v1849
        %v1972 = vadd.f32 %v1642, %v1854
        %v1973 = vadd.f32 %v1644, %v1854
        %v1974 = vadd.f32 %v1648, %v1859
        %v1975 = vadd.f32 %v1650, %v1859
        %v1976 = vadd.f32 %v1654, %v1864
        %v1977 = vadd.f32 %v1656, %v1864
        %v1978 = vadd.f32 %v1660, %v1869
        %v1979 = vadd.f32 %v1662, %v1869
        %v1980 = vadd.f32 %v1666, %v1874
        %v1981 = vadd.f32 %v1668, %v1874
        %v1982 = vadd.f32 %v1672, %v1879
        %v1983 = vadd.f32 %v1674, %v1879
        %v1984 = vadd.f32 %v1678, %v1884
        %v1985 = vadd.f32 %v1680, %v1884
        %v1986 = vadd.f32 %v1684, %v1889
        %v1987 = vadd.f32 %v1686, %v1889
        %v1988 = vadd.f32 %v1690, %v1894
        %v1989 = vadd.f32 %v1692, %v1894
        %v1990 = vadd.f32 %v1696, %v1899
        %v1991 = vadd.f32 %v1698, %v1899
        %v1992 = vadd.f32 %v1702, %v1904
        %v1993 = vadd.f32 %v1704, %v1904
        %v1994 = vadd.f32 %v1708, %v1909
        %v1995 = vadd.f32 %v1710, %v1909
        %v1996 = vadd.f32 %v1714, %v1914
        %v1997 = vadd.f32 %v1716, %v1914
        %v1998 = vadd.f32 %v1720, %v1919
        %v1999 = vadd.f32 %v1722, %v1919
        %v2000 = vadd.f32 %v1726, %v1924
        %v2001 = vadd.f32 %v1728, %v1924
        %v2002 = vadd.f32 %v1732, %v1929
        %v2003 = vadd.f32 %v1734, %v1929
        %v2004 = vadd.f32 %v1738, %v1934
        %v2005 = vadd.f32 %v1740, %v1934
        %v2006 = vadd.f32 %v1744, %v1939
        %v2007 = vadd.f32 %v1746, %v1939
        %v2008 = vadd.f32 %v1750, %v1944
        %v2009 = vadd.f32 %v1752, %v1944
        %2010 = vst [vmem:[%s327] sm:$0xff] %v1946
        %2011 = vst [vmem:[%s327 + $0x8] sm:$0xff] %v1947
        %2012 = vst [vmem:[%s327 + $0x10] sm:$0xff] %v1948
        %2013 = vst [vmem:[%s327 + $0x18] sm:$0xff] %v1949
        %2014 = vst [vmem:[%s327 + $0x20] sm:$0xff] %v1950
        %2015 = vst [vmem:[%s327 + $0x28] sm:$0xff] %v1951
        %2016 = vst [vmem:[%s327 + $0x30] sm:$0xff] %v1952
        %2017 = vst [vmem:[%s327 + $0x38] sm:$0xff] %v1953
        %2018 = vst [vmem:[%s327 + $0x40] sm:$0xff] %v1954
        %2019 = vst [vmem:[%s327 + $0x48] sm:$0xff] %v1955
        %2020 = vst [vmem:[%s327 + $0x50] sm:$0xff] %v1956
        %2021 = vst [vmem:[%s327 + $0x58] sm:$0xff] %v1957
        %2022 = vst [vmem:[%s327 + $0x60] sm:$0xff] %v1958
        %2023 = vst [vmem:[%s327 + $0x68] sm:$0xff] %v1959
        %2024 = vst [vmem:[%s327 + $0x70] sm:$0xff] %v1960
        %2025 = vst [vmem:[%s327 + $0x78] sm:$0xff] %v1961
        %2026 = vst [vmem:[%s327 + $0x80] sm:$0xff] %v1962
        %2027 = vst [vmem:[%s327 + $0x88] sm:$0xff] %v1963
        %2028 = vst [vmem:[%s327 + $0x90] sm:$0xff] %v1964
        %2029 = vst [vmem:[%s327 + $0x98] sm:$0xff] %v1965
        %2030 = vst [vmem:[%s327 + $0xa0] sm:$0xff] %v1966
        %2031 = vst [vmem:[%s327 + $0xa8] sm:$0xff] %v1967
        %2032 = vst [vmem:[%s327 + $0xb0] sm:$0xff] %v1968
        %2033 = vst [vmem:[%s327 + $0xb8] sm:$0xff] %v1969
        %2034 = vst [vmem:[%s327 + $0xc0] sm:$0xff] %v1970
        %2035 = vst [vmem:[%s327 + $0xc8] sm:$0xff] %v1971
        %2036 = vst [vmem:[%s327 + $0xd0] sm:$0xff] %v1972
        %2037 = vst [vmem:[%s327 + $0xd8] sm:$0xff] %v1973
        %2038 = vst [vmem:[%s327 + $0xe0] sm:$0xff] %v1974
        %2039 = vst [vmem:[%s327 + $0xe8] sm:$0xff] %v1975
        %2040 = vst [vmem:[%s327 + $0xf0] sm:$0xff] %v1976
        %2041 = vst [vmem:[%s327 + $0xf8] sm:$0xff] %v1977
        %2042 = vst [vmem:[%s327 + $0x100] sm:$0xff] %v1978
        %2043 = vst [vmem:[%s327 + $0x108] sm:$0xff] %v1979
        %2044 = vst [vmem:[%s327 + $0x110] sm:$0xff] %v1980
        %2045 = vst [vmem:[%s327 + $0x118] sm:$0xff] %v1981
        %2046 = vst [vmem:[%s327 + $0x120] sm:$0xff] %v1982
        %2047 = vst [vmem:[%s327 + $0x128] sm:$0xff] %v1983
        %2048 = vst [vmem:[%s327 + $0x130] sm:$0xff] %v1984
        %2049 = vst [vmem:[%s327 + $0x138] sm:$0xff] %v1985
        %2050 = vst [vmem:[%s327 + $0x140] sm:$0xff] %v1986
        %2051 = vst [vmem:[%s327 + $0x148] sm:$0xff] %v1987
        %2052 = vst [vmem:[%s327 + $0x150] sm:$0xff] %v1988
        %2053 = vst [vmem:[%s327 + $0x158] sm:$0xff] %v1989
        %2054 = vst [vmem:[%s327 + $0x160] sm:$0xff] %v1990
        %2055 = vst [vmem:[%s327 + $0x168] sm:$0xff] %v1991
        %2056 = vst [vmem:[%s327 + $0x170] sm:$0xff] %v1992
        %2057 = vst [vmem:[%s327 + $0x178] sm:$0xff] %v1993
        %2058 = vst [vmem:[%s327 + $0x180] sm:$0xff] %v1994
        %2059 = vst [vmem:[%s327 + $0x188] sm:$0xff] %v1995
        %2060 = vst [vmem:[%s327 + $0x190] sm:$0xff] %v1996
        %2061 = vst [vmem:[%s327 + $0x198] sm:$0xff] %v1997
        %2062 = vst [vmem:[%s327 + $0x1a0] sm:$0xff] %v1998
        %2063 = vst [vmem:[%s327 + $0x1a8] sm:$0xff] %v1999
        %2064 = vst [vmem:[%s327 + $0x1b0] sm:$0xff] %v2000
        %2065 = vst [vmem:[%s327 + $0x1b8] sm:$0xff] %v2001
        %2066 = vst [vmem:[%s327 + $0x1c0] sm:$0xff] %v2002
        %2067 = vst [vmem:[%s327 + $0x1c8] sm:$0xff] %v2003
        %2068 = vst [vmem:[%s327 + $0x1d0] sm:$0xff] %v2004
        %2069 = vst [vmem:[%s327 + $0x1d8] sm:$0xff] %v2005
        %2070 = vst [vmem:[%s327 + $0x1e0] sm:$0xff] %v2006
        %2071 = vst [vmem:[%s327 + $0x1e8] sm:$0xff] %v2007
        %2072 = vst [vmem:[%s327 + $0x1f0] sm:$0xff] %v2008
        %2073 = vst [vmem:[%s327 + $0x1f8] sm:$0xff] %v2009
        %s2074 = sand.u32 %s207, 1
        %s2075 = scalar_lea.sflag [#allocation3], %s2074
        %s2076 = sand.u32 %s207, 1
        %s2077 = smul.addr %s2076, 512
        %s2078 = scalar_lea.vmem [#allocation2], %s2077
        // Predicated region
        $region49: #{tpu_custom_call.1} parent=47 // pred_check
          %p2079 = pneg %p217
        $region50: #{tpu_custom_call.1} parent=47 // pred_check_branch
          %2081 = sbr.rel (%p2079) target = $region52
        $region51: #{tpu_custom_call.1} parent=47 // pred_region
          %s2082 = smul.u32 2, %s26
          %s2084 = ssub.s32 8192, 8192
          %2085 = vsyncadd %s2075, %s2084
          %s2086 = smul.addr %s25, 64
          %s2087 = sadd.s32 %s2082, %s2086
          %s2088 = smul.addr %s2087, 128
          %s2089 = scalar_lea.hbm %s7, %s2088
          %s2090 = sshll.u32 %s2078, 4
          %s2091 = int_to_ptr.vmem [resolvable:$true] %s2090
          %2096 = dma.vmem_to_hbm [thread:$0]  %s2091, 8192, %s2089, %s2075, 256, 256, 16
        $region52: #{tpu_custom_call.1} parent=47 // pred_fallthru
          _
      $region48: #{tpu_custom_call.1} parent=5 // pred_fallthru
        _
      %p2097 = scmp.le.s32.totalorder 2, %s16
      // Predicated region
      $region53: #{tpu_custom_call.1} parent=5 // pred_check
        %p2098 = pneg %p2097
      $region54: #{tpu_custom_call.1} parent=5 // pred_check_branch
        %2100 = sbr.rel (%p2098) target = $region56
      $region55: #{tpu_custom_call.1} parent=5 // pred_region
        %s2101 = ssub.s32 %s16, 2
        // Predicated region
        $region57: #{tpu_custom_call.1} parent=55 // pred_check
          %p2102 = pneg %p223
        $region58: #{tpu_custom_call.1} parent=55 // pred_check_branch
          %2104 = sbr.rel (%p2102) target = $region60
        $region59: #{tpu_custom_call.1} parent=55 // pred_region
          %s2105 = sand.u32 %s208, 1
          %s2106 = scalar_lea.sflag [#allocation3], %s2105
          %s2107 = sand.u32 %s208, 1
          %s2108 = smul.addr %s2107, 512
          %s2109 = scalar_lea.vmem [#allocation2], %s2108
          %2110 = dma.done %s2106, 8192
        $region60: #{tpu_custom_call.1} parent=55 // pred_fallthru
          _
      $region56: #{tpu_custom_call.1} parent=5 // pred_fallthru
        _
    $region6: #{tpu_custom_call.1} parent=1 // loop_footer
      %s20 = sadd.s32 1, %s16
    $region7: #{tpu_custom_call.1} parent=1 // loop_footer_branch
      %15 = sbr.rel target = $region3
    $region8: #{tpu_custom_call.1} parent=1 // loop_exit
      _
    %2111 = vsyncpa [#allocation3], 1
    %s2112 = scalar_lea.sflag [#allocation3], 1
    %2113 = vsyncpa %s2112, 1

</llo_original>
